<compile_context>
chip_gen: v7x
topology: tpu7x:2x2x1
jax: 0.10.0
libtpu: 0.0.40
codegen_flags: <defaults>
</compile_context>

<pallas_src>
import functools

import jax
import jax.numpy as jnp
from jax.experimental import pallas as pl
from jax.experimental.pallas import tpu as pltpu

TP = 2048         # voxel rows per grid step (sweep 2048-4096)
BETA = 0.25       # standard VQ commitment cost


def _round_up(x, m):
    return ((x + m - 1) // m) * m


# ----------------------------------------------------------------------------
# Fused Pallas kernel: (enc+quant) -> VQ argmin -> (codebook+post+decoder).
# ----------------------------------------------------------------------------
def vqvae_fused_kernel(p_actual,                      # static: true #voxels
                       x_ref, weq_ref, beq_ref,       # input tile + folded enc
                       wse_ref, bse_ref,              # folded score (-2, ||e||^2)
                       edec_ref, bdec_ref,            # codebook folded into decoder
                       out_ref, loss_ref):
    tp = x_ref.shape[0]
    kp = wse_ref.shape[1]

    x = x_ref[...]                                                     # (TP, C)

    # encoder stub + quant_conv (pre-folded): z = x @ W_eq + b_eq.
    # Only needed for the ||z||^2 term of the loss.
    z = jnp.dot(x, weq_ref[...], preferred_element_type=jnp.float32) + beq_ref[...]

    # VQ score with -2 / ||e||^2 folded into the weights:
    #   score_k = ||e_k||^2 - 2 z.e_k   (per-row ||z||^2 dropped: argmin-invariant)
    score = (jnp.dot(x, wse_ref[...], preferred_element_type=jnp.float32)
             + bse_ref[...])                                           # (TP, Kp)

    min_s = jnp.min(score, axis=1, keepdims=True)                      # (TP, 1)
    iota_k = jax.lax.broadcasted_iota(jnp.int32, score.shape, 1)
    # first-occurrence tie-breaking (matches torch.argmin); padded codes carry
    # a +1e30 bias so they never equal min_s.
    idx = jnp.min(jnp.where(score == min_s, iota_k, kp), axis=1, keepdims=True)
    onehot = (iota_k == idx).astype(edec_ref.dtype)                    # (TP, Kp)

    # post_quant_conv + 3 concatenated decoder heads, codebook pre-folded:
    #   out = E_dec[idx] + b_dec   ==   onehot @ E_dec + b_dec
    out_ref[...] = (jnp.dot(onehot, edec_ref[...],
                            preferred_element_type=jnp.float32)
                    + bdec_ref[...]).astype(out_ref.dtype)             # (TP, 3C)

    # VQ loss partial: sum over VALID rows of ||q - z||^2 == min_s + ||z||^2
    # (exact identity for the argmin code).  Padded rows are masked out.
    rows = pl.program_id(0) * tp + jax.lax.broadcasted_iota(jnp.int32, (tp, 1), 0)
    row_loss = jnp.where(rows < p_actual,
                         min_s + jnp.sum(z * z, axis=1, keepdims=True),
                         0.0)                                          # (TP, 1)
    tile_loss = jnp.sum(row_loss, axis=0, keepdims=True)               # (1, 1)
    loss_ref[...] = tile_loss[None]                                    # (1, 1, 1)


# ----------------------------------------------------------------------------
# Wrapper-side weight folding (exact for 1x1x1 convs) + K padding + casts.
# ----------------------------------------------------------------------------
def _fold_params(params, stream_dtype):
    e = params["codebook"].astype(jnp.float32)                         # (K, C)
    K, _ = e.shape
    Kp = _round_up(K, 128)

    w_eq = params["enc_w"] @ params["quant_w"]                         # (C, C)
    b_eq = params["enc_b"] @ params["quant_w"] + params["quant_b"]     # (1, C)

    # score = x @ W_se + b_se == ||e||^2 - 2 (x W_eq + b_eq) . e
    w_se = -2.0 * (w_eq @ e.T)                                         # (C, K)
    b_se = jnp.sum(e * e, axis=1)[None, :] - 2.0 * (b_eq @ e.T)        # (1, K)

    # decode = q @ (post_w @ dec_w) + (post_b @ dec_w + dec_b), q = e[idx]
    w_dec = jnp.concatenate([params["post_w"] @ params[f"{h}_w"]
                             for h in ("dec1", "dec2", "dec3")], axis=1)   # (C, 3C)
    b_dec = jnp.concatenate([params["post_b"] @ params[f"{h}_w"] + params[f"{h}_b"]
                             for h in ("dec1", "dec2", "dec3")], axis=1)   # (1, 3C)
    e_dec = e @ w_dec                                                  # (K, 3C)

    if Kp != K:  # lane-dense K: padded codes must never win the argmin
        w_se = jnp.pad(w_se, ((0, 0), (0, Kp - K)))
        b_se = jnp.pad(b_se, ((0, 0), (0, Kp - K)), constant_values=1e30)
        e_dec = jnp.pad(e_dec, ((0, Kp - K), (0, 0)))

    return {
        "w_eq": w_eq.astype(stream_dtype), "b_eq": b_eq.astype(jnp.float32),
        "w_se": w_se.astype(stream_dtype), "b_se": b_se.astype(jnp.float32),
        "e_dec": e_dec.astype(stream_dtype), "b_dec": b_dec.astype(jnp.float32),
    }


# ----------------------------------------------------------------------------
# Wrapper: layout plumbing + single pallas_call.
# ----------------------------------------------------------------------------
def vqvae_forward(x, params, *, tp=TP, stream_dtype=jnp.bfloat16):
    # x: [N, C, D1, D2, D3]  (PyTorch NCDHW convention)
    N, C, D1, D2, D3 = x.shape
    P = N * D1 * D2 * D3

    f = _fold_params(params, stream_dtype)
    Kp = f["w_se"].shape[1]
    CO = f["e_dec"].shape[1]          # 3*C

    # ---- layout: NCDHW -> (P, C) channels-last, one pass ----
    # TODO(synk): if the caller can produce/consume channels-last tensors these
    # two wrapper transposes (dominant HBM cost at large P) disappear entirely.
    xf = jnp.transpose(x, (0, 2, 3, 4, 1)).reshape(P, C).astype(stream_dtype)

    # ---- tiling: multiple-of-8 rows; guarantee >= 2 tiles so the single
    # "parallel" grid axis shards across both v7x TensorCores ----
    half = _round_up(max((P + 1) // 2, 8), 8)
    tp_eff = max(8, min(tp, half))
    p_pad = _round_up(P, tp_eff)
    if p_pad != P:
        xf = jnp.pad(xf, ((0, p_pad - P), (0, 0)))
    n_tiles = p_pad // tp_eff

    out_pad, loss_parts = pl.pallas_call(
        functools.partial(vqvae_fused_kernel, P),
        out_shape=(
            jax.ShapeDtypeStruct((p_pad, CO), jnp.float32),
            jax.ShapeDtypeStruct((n_tiles, 1, 1), jnp.float32),
        ),
        grid_spec=pltpu.PrefetchScalarGridSpec(
            num_scalar_prefetch=0,
            grid=(n_tiles,),
            in_specs=[
                pl.BlockSpec((tp_eff, C), lambda i: (i, 0)),     # x tile
                pl.BlockSpec((C, C), lambda i: (0, 0)),          # W_eq
                pl.BlockSpec((1, C), lambda i: (0, 0)),          # b_eq
                pl.BlockSpec((C, Kp), lambda i: (0, 0)),         # W_se
                pl.BlockSpec((1, Kp), lambda i: (0, 0)),         # b_se
                pl.BlockSpec((Kp, CO), lambda i: (0, 0)),        # E_dec
                pl.BlockSpec((1, CO), lambda i: (0, 0)),         # b_dec
            ],
            out_specs=(
                pl.BlockSpec((tp_eff, CO), lambda i: (i, 0)),
                pl.BlockSpec((1, 1, 1), lambda i: (i, 0, 0)),
            ),
        ),
        compiler_params=pltpu.CompilerParams(
            dimension_semantics=("parallel",)),
    )(xf, f["w_eq"], f["b_eq"], f["w_se"], f["b_se"], f["e_dec"], f["b_dec"])

    # vq_loss = embedding_loss + beta * commitment_loss; forward value is
    # (1 + beta) * mean((q - z)^2) (both terms coincide in the forward pass).
    vq_loss = (1.0 + BETA) * jnp.sum(loss_parts) / (P * C)

    # one fused (P, 3C) -> (3, N, C, D1, D2, D3) transpose instead of
    # three separate slice + reshape + transpose passes.
    out = out_pad[:P].reshape(N, D1, D2, D3, 3, C)
    out = jnp.transpose(out, (4, 0, 5, 1, 2, 3))
    return out[0], out[1], out[2], vq_loss


# ----------------------------------------------------------------------------
# Pure-JAX reference (un-fused, un-folded, f32) for correctness checking.
# ----------------------------------------------------------------------------
def vqvae_forward_ref(x, params):
    N, C, D1, D2, D3 = x.shape
    xf = jnp.transpose(x, (0, 2, 3, 4, 1)).reshape(-1, C)
    z = (xf @ params["enc_w"] + params["enc_b"]) @ params["quant_w"] + params["quant_b"]
    e = params["codebook"]
    d = (jnp.sum(z * z, axis=1, keepdims=True)
         - 2.0 * z @ e.T + jnp.sum(e * e, axis=1)[None, :])
    q = e[jnp.argmin(d, axis=1)]
    vq_loss = (1.0 + BETA) * jnp.mean((q - z) ** 2)
    post = q @ params["post_w"] + params["post_b"]
    outs = []
    for h in ("dec1", "dec2", "dec3"):
        o = post @ params[f"{h}_w"] + params[f"{h}_b"]
        outs.append(jnp.transpose(o.reshape(N, D1, D2, D3, C), (0, 4, 1, 2, 3)))
    return outs[0], outs[1], outs[2], vq_loss


# ----------------------------------------------------------------------------
# Parameter setup (encoder/decoder stubs + real quant/post/VQ parameters).
# ----------------------------------------------------------------------------
def init_params(key, num_classes, vq_size):
    C = num_classes
    K = num_classes * vq_size
    ks = jax.random.split(key, 13)
    n = lambda k, s: 0.1 * jax.random.normal(k, s, jnp.float32)
    return {
        "enc_w": n(ks[0], (C, C)), "enc_b": n(ks[1], (1, C)),    # TODO(synk): real C_Encoder
        "quant_w": n(ks[2], (C, C)), "quant_b": n(ks[3], (1, C)),
        "codebook": n(ks[4], (K, C)),
        "post_w": n(ks[5], (C, C)), "post_b": n(ks[6], (1, C)),
        "dec1_w": n(ks[7], (C, C)), "dec1_b": n(ks[8], (1, C)),  # TODO(synk): real C_Decoder
        "dec2_w": n(ks[9], (C, C)), "dec2_b": n(ks[10], (1, C)),
        "dec3_w": n(ks[11], (C, C)), "dec3_b": n(ks[12], (1, C)),
    }


if __name__ == "__main__":
    num_classes, vq_size = 16, 8          # K = 128 codebook entries, C = 16
    N, D1, D2, D3 = 2, 8, 8, 4            # P = 2*8*8*4 = 512 voxels

    key = jax.random.PRNGKey(0)
    kx, kp = jax.random.split(key)
    x = jax.random.normal(kx, (N, num_classes, D1, D2, D3), jnp.float32)
    params = init_params(kp, num_classes, vq_size)

    r1, r2, r3, rloss = vqvae_forward_ref(x, params)

    # 1) f32 streaming: bit-faithful forward semantics, strict check vs reference.
    fwd32 = jax.jit(functools.partial(vqvae_forward, stream_dtype=jnp.float32))
    x1, x2, x3, vq_loss = fwd32(x, params)
    jax.block_until_ready((x1, x2, x3, vq_loss))
    assert x1.shape == (N, num_classes, D1, D2, D3)
    assert x2.shape == x1.shape and x3.shape == x1.shape
    assert vq_loss.shape == ()
    for got, ref in ((x1, r1), (x2, r2), (x3, r3), (vq_loss, rloss)):
        err = float(jnp.max(jnp.abs(got - ref)))
        assert err < 1e-4, f"f32 mismatch: max abs err {err}"

    # 2) bf16 streaming (default perf path): halves HBM bytes per row.  The VQ
    #    argmin can legitimately flip on near-equidistant codes under bf16, so
    #    validate the (argmin-continuous) loss and run cleanliness here.
    fwd16 = jax.jit(vqvae_forward)
    y1, y2, y3, loss16 = fwd16(x, params)
    jax.block_until_ready((y1, y2, y3, loss16))
    assert bool(jnp.all(jnp.isfinite(y1)) & jnp.all(jnp.isfinite(y2))
                & jnp.all(jnp.isfinite(y3)) & jnp.isfinite(loss16))
    rel = float(jnp.abs(loss16 - rloss) / jnp.abs(rloss))
    assert rel < 2e-2, f"bf16 loss rel err {rel}"

    print("KERNEL_OK")
</pallas_src>

<mosaic_0001>
module attributes {stable_mosaic.version = 11 : i64} {
  func.func @vqvae_fused_kernel(%arg0: i32, %arg1: memref<256x16xf32, #tpu.memory_space<vmem>>, %arg2: memref<16x16xf32, #tpu.memory_space<vmem>>, %arg3: memref<1x16xf32, #tpu.memory_space<vmem>>, %arg4: memref<16x128xf32, #tpu.memory_space<vmem>>, %arg5: memref<1x128xf32, #tpu.memory_space<vmem>>, %arg6: memref<128x48xf32, #tpu.memory_space<vmem>>, %arg7: memref<1x48xf32, #tpu.memory_space<vmem>>, %arg8: memref<256x48xf32, #tpu.memory_space<vmem>>, %arg9: memref<1x1x1xf32, #tpu.memory_space<vmem>>) attributes {dimension_semantics = [#tpu.dimension_semantics<parallel>], iteration_bounds = array<i64: 2>, scalar_prefetch = 0 : i64, scratch_operands = 0 : i64, tpu.core_type = #tpu.core_type<tc>, window_params = [{transform_indices = @transform_0, window_bounds = array<i64: 256, 16>}, {pipeline_mode = #tpu.pipeline_mode<synchronous>, transform_indices = @transform_1, window_bounds = array<i64: 16, 16>}, {pipeline_mode = #tpu.pipeline_mode<synchronous>, transform_indices = @transform_2, window_bounds = array<i64: 1, 16>}, {pipeline_mode = #tpu.pipeline_mode<synchronous>, transform_indices = @transform_3, window_bounds = array<i64: 16, 128>}, {pipeline_mode = #tpu.pipeline_mode<synchronous>, transform_indices = @transform_4, window_bounds = array<i64: 1, 128>}, {pipeline_mode = #tpu.pipeline_mode<synchronous>, transform_indices = @transform_5, window_bounds = array<i64: 128, 48>}, {pipeline_mode = #tpu.pipeline_mode<synchronous>, transform_indices = @transform_6, window_bounds = array<i64: 1, 48>}, {transform_indices = @transform_7, window_bounds = array<i64: 256, 48>}, {transform_indices = @transform_8, window_bounds = array<i64: 1, 1, 1>}]} {
    %c0 = arith.constant 0 : index
    %c0_0 = arith.constant 0 : index
    %0 = vector.load %arg1[%c0, %c0_0] : memref<256x16xf32, #tpu.memory_space<vmem>>, vector<256x16xf32>
    %c0_1 = arith.constant 0 : index
    %c0_2 = arith.constant 0 : index
    %1 = vector.load %arg2[%c0_1, %c0_2] : memref<16x16xf32, #tpu.memory_space<vmem>>, vector<16x16xf32>
    %cst = arith.constant dense<0.000000e+00> : vector<256x16xf32>
    %2 = tpu.matmul %0, %1, %cst {dimension_numbers = #tpu.dot_dimension_numbers<[1], [0], [0], [1], [0, 0, 1, 1], [], []>} : vector<256x16xf32>, vector<16x16xf32>, vector<256x16xf32> -> vector<256x16xf32>
    %c0_3 = arith.constant 0 : index
    %c0_4 = arith.constant 0 : index
    %3 = vector.load %arg3[%c0_3, %c0_4] : memref<1x16xf32, #tpu.memory_space<vmem>>, vector<1x16xf32>
    %4 = vector.broadcast %3 : vector<1x16xf32> to vector<256x16xf32>
    %5 = arith.addf %2, %4 : vector<256x16xf32>
    %c0_5 = arith.constant 0 : index
    %c0_6 = arith.constant 0 : index
    %6 = vector.load %arg4[%c0_5, %c0_6] : memref<16x128xf32, #tpu.memory_space<vmem>>, vector<16x128xf32>
    %cst_7 = arith.constant dense<0.000000e+00> : vector<256x128xf32>
    %7 = tpu.matmul %0, %6, %cst_7 {dimension_numbers = #tpu.dot_dimension_numbers<[1], [0], [0], [1], [0, 0, 1, 1], [], []>} : vector<256x16xf32>, vector<16x128xf32>, vector<256x128xf32> -> vector<256x128xf32>
    %c0_8 = arith.constant 0 : index
    %c0_9 = arith.constant 0 : index
    %8 = vector.load %arg5[%c0_8, %c0_9] : memref<1x128xf32, #tpu.memory_space<vmem>>, vector<1x128xf32>
    %9 = vector.broadcast %8 : vector<1x128xf32> to vector<256x128xf32>
    %10 = arith.addf %7, %9 : vector<256x128xf32>
    %cst_10 = arith.constant dense<0x7F800000> : vector<256xf32>
    %11 = vector.multi_reduction <minimumf>, %10, %cst_10 [1] : vector<256x128xf32> to vector<256xf32>
    %12 = vector.shape_cast %11 : vector<256xf32> to vector<256x1xf32>
    %13 = tpu.iota {dimensions = array<i32: 1>} : vector<256x128xi32>
    %14 = vector.broadcast %12 : vector<256x1xf32> to vector<256x128xf32>
    %15 = arith.cmpf oeq, %10, %14 : vector<256x128xf32>
    %c128_i32 = arith.constant 128 : i32
    %16 = vector.broadcast %c128_i32 : i32 to vector<256x128xi32>
    %17 = arith.select %15, %13, %16 : vector<256x128xi1>, vector<256x128xi32>
    %cst_11 = arith.constant dense<2147483647> : vector<256xi32>
    %18 = vector.multi_reduction <minsi>, %17, %cst_11 [1] : vector<256x128xi32> to vector<256xi32>
    %19 = vector.shape_cast %18 : vector<256xi32> to vector<256x1xi32>
    %20 = vector.broadcast %19 : vector<256x1xi32> to vector<256x128xi32>
    %21 = arith.cmpi eq, %13, %20 : vector<256x128xi32>
    %22 = arith.extui %21 : vector<256x128xi1> to vector<256x128xi32>
    %23 = arith.sitofp %22 : vector<256x128xi32> to vector<256x128xf32>
    %c0_12 = arith.constant 0 : index
    %c0_13 = arith.constant 0 : index
    %24 = vector.load %arg6[%c0_12, %c0_13] : memref<128x48xf32, #tpu.memory_space<vmem>>, vector<128x48xf32>
    %cst_14 = arith.constant dense<0.000000e+00> : vector<256x48xf32>
    %25 = tpu.matmul %23, %24, %cst_14 {dimension_numbers = #tpu.dot_dimension_numbers<[1], [0], [0], [1], [0, 0, 1, 1], [], []>} : vector<256x128xf32>, vector<128x48xf32>, vector<256x48xf32> -> vector<256x48xf32>
    %c0_15 = arith.constant 0 : index
    %c0_16 = arith.constant 0 : index
    %26 = vector.load %arg7[%c0_15, %c0_16] : memref<1x48xf32, #tpu.memory_space<vmem>>, vector<1x48xf32>
    %27 = vector.broadcast %26 : vector<1x48xf32> to vector<256x48xf32>
    %28 = arith.addf %25, %27 : vector<256x48xf32>
    %c0_17 = arith.constant 0 : index
    %c0_18 = arith.constant 0 : index
    %29 = vector.load %arg8[%c0_17, %c0_18] : memref<256x48xf32, #tpu.memory_space<vmem>>, vector<256x48xf32>
    tpu.vector_store %arg8[%c0_17, %c0_18], %28 {strides = array<i32>} : memref<256x48xf32, #tpu.memory_space<vmem>>, vector<256x48xf32>,
    %c256_i32 = arith.constant 256 : i32
    %30 = arith.muli %arg0, %c256_i32 : i32
    %31 = tpu.iota {dimensions = array<i32: 0>} : vector<256x1xi32>
    %32 = vector.broadcast %30 : i32 to vector<256x1xi32>
    %33 = arith.addi %32, %31 : vector<256x1xi32>
    %c512_i32 = arith.constant 512 : i32
    %34 = vector.broadcast %c512_i32 : i32 to vector<256x1xi32>
    %35 = arith.cmpi slt, %33, %34 : vector<256x1xi32>
    %36 = arith.mulf %5, %5 : vector<256x16xf32>
    %cst_19 = arith.constant dense<0.000000e+00> : vector<256xf32>
    %37 = vector.multi_reduction <add>, %36, %cst_19 [1] : vector<256x16xf32> to vector<256xf32>
    %38 = vector.shape_cast %37 : vector<256xf32> to vector<256x1xf32>
    %39 = arith.addf %12, %38 : vector<256x1xf32>
    %cst_20 = arith.constant 0.000000e+00 : f32
    %40 = vector.broadcast %cst_20 : f32 to vector<256x1xf32>
    %41 = arith.select %35, %39, %40 : vector<256x1xi1>, vector<256x1xf32>
    %cst_21 = arith.constant dense<0.000000e+00> : vector<1xf32>
    %42 = vector.multi_reduction <add>, %41, %cst_21 [0] : vector<256x1xf32> to vector<1xf32>
    %43 = vector.shape_cast %42 : vector<1xf32> to vector<1x1xf32>
    %44 = vector.shape_cast %43 : vector<1x1xf32> to vector<1x1x1xf32>
    %c0_22 = arith.constant 0 : index
    %c0_23 = arith.constant 0 : index
    %c0_24 = arith.constant 0 : index
    %45 = vector.load %arg9[%c0_22, %c0_23, %c0_24] : memref<1x1x1xf32, #tpu.memory_space<vmem>>, vector<1x1x1xf32>
    tpu.vector_store %arg9[%c0_22, %c0_23, %c0_24], %44 {strides = array<i32>} : memref<1x1x1xf32, #tpu.memory_space<vmem>>, vector<1x1x1xf32>,
    return
  }
  func.func @transform_0(%arg0: i32) -> (i32, i32) {
    %c0_i32 = arith.constant 0 : i32
    %c0_i32_0 = arith.constant 0 : i32
    return %arg0, %c0_i32 : i32, i32
  }
  func.func @transform_1(%arg0: i32) -> (i32, i32) {
    %c0_i32 = arith.constant 0 : i32
    %c0_i32_0 = arith.constant 0 : i32
    %c0_i32_1 = arith.constant 0 : i32
    return %c0_i32, %c0_i32_0 : i32, i32
  }
  func.func @transform_2(%arg0: i32) -> (i32, i32) {
    %c0_i32 = arith.constant 0 : i32
    %c0_i32_0 = arith.constant 0 : i32
    %c0_i32_1 = arith.constant 0 : i32
    return %c0_i32, %c0_i32_0 : i32, i32
  }
  func.func @transform_3(%arg0: i32) -> (i32, i32) {
    %c0_i32 = arith.constant 0 : i32
    %c0_i32_0 = arith.constant 0 : i32
    %c0_i32_1 = arith.constant 0 : i32
    return %c0_i32, %c0_i32_0 : i32, i32
  }
  func.func @transform_4(%arg0: i32) -> (i32, i32) {
    %c0_i32 = arith.constant 0 : i32
    %c0_i32_0 = arith.constant 0 : i32
    %c0_i32_1 = arith.constant 0 : i32
    return %c0_i32, %c0_i32_0 : i32, i32
  }
  func.func @transform_5(%arg0: i32) -> (i32, i32) {
    %c0_i32 = arith.constant 0 : i32
    %c0_i32_0 = arith.constant 0 : i32
    %c0_i32_1 = arith.constant 0 : i32
    return %c0_i32, %c0_i32_0 : i32, i32
  }
  func.func @transform_6(%arg0: i32) -> (i32, i32) {
    %c0_i32 = arith.constant 0 : i32
    %c0_i32_0 = arith.constant 0 : i32
    %c0_i32_1 = arith.constant 0 : i32
    return %c0_i32, %c0_i32_0 : i32, i32
  }
  func.func @transform_7(%arg0: i32) -> (i32, i32) {
    %c0_i32 = arith.constant 0 : i32
    %c0_i32_0 = arith.constant 0 : i32
    return %arg0, %c0_i32 : i32, i32
  }
  func.func @transform_8(%arg0: i32) -> (i32, i32, i32) {
    %c0_i32 = arith.constant 0 : i32
    %c0_i32_0 = arith.constant 0 : i32
    %c0_i32_1 = arith.constant 0 : i32
    return %arg0, %c0_i32, %c0_i32_0 : i32, i32, i32
  }
}

</mosaic_0001>

<llo_original>
// kernel: vqvae_forward.1
$region0: #{vqvae_forward.1}
  #allocation0 [shape = 'u32[]', space=smem, size = 0x4, offset = 0x4, fixed_abs, tag = 'smem constant byte address 0x4 - core index']
  #allocation1 [shape = 'u32[144,128]{1,0:T(1,128)}', space=vmem, size = 0x12000, scoped, tag = 'internal scratch']
  %s0 = inlined_call_operand.vmem [shape: f32[512,16], index: 0, kind: input, shape index: {}]
  %s1 = inlined_call_operand.vmem [shape: f32[16,16], index: 1, kind: input, shape index: {}]
  %s2 = inlined_call_operand.vmem [shape: f32[1,16], index: 2, kind: input, shape index: {}]
  %s3 = inlined_call_operand.vmem [shape: f32[16,128], index: 3, kind: input, shape index: {}]
  %s4 = inlined_call_operand.vmem [shape: f32[1,128], index: 4, kind: input, shape index: {}]
  %s5 = inlined_call_operand.vmem [shape: f32[128,48], index: 5, kind: input, shape index: {}]
  %s6 = inlined_call_operand.vmem [shape: f32[1,48], index: 6, kind: input, shape index: {}]
  %s7 = inlined_call_operand.vmem [shape: f32[512,48], index: 7, kind: output, shape index: {0}]
  %s8 = inlined_call_operand.vmem [shape: f32[2,1,1], index: 8, kind: output, shape index: {1}]
  %9 = xla_tuple %s7, %s8
  %s10 = sld [smem:[#allocation0]]
  $region69: #{vqvae_forward.1} parent=0
    _
  %s12 = ssub.s32 1, %s10
  %s13 = scalar_select 0, %s12, %s10
  loop: start=0, step=1, limit=4
  $region2: #{vqvae_forward.1} parent=0 // loop_pre_header
    _
  $region3: #{vqvae_forward.1} parent=0 // loop_header
    %s15 = sphi 0, %s19
    %p16 = scmp.ge.s32.totalorder %s15, 4
    %s25 = sphi 0, %s27
    %s28 = sphi 0, %s25
    %s29 = sphi 0, %s28
    %s45 = sphi 0, %s29
    %s49 = sphi 0, %s49
    %s51 = sphi 0, %s49
    %s52 = sphi 0, %s51
    %s66 = sphi 0, %s52
    %s70 = sphi 0, %s70
    %s72 = sphi 0, %s70
    %s73 = sphi 0, %s72
    %s87 = sphi 0, %s73
    %s91 = sphi 0, %s91
    %s93 = sphi 0, %s91
    %s94 = sphi 0, %s93
    %s108 = sphi 0, %s94
    %s112 = sphi 0, %s112
    %s114 = sphi 0, %s112
    %s115 = sphi 0, %s114
    %s129 = sphi 0, %s115
    %s133 = sphi 0, %s133
    %s135 = sphi 0, %s133
    %s136 = sphi 0, %s135
    %s150 = sphi 0, %s136
    %s154 = sphi 0, %s154
    %s156 = sphi 0, %s154
    %s157 = sphi 0, %s156
    %s171 = sphi 0, %s157
    %s177 = sphi 0, %s179
    %s180 = sphi 0, %s177
    %s181 = sphi 0, %s180
    %s197 = sphi 0, %s181
    %s203 = sphi 0, %s205
    %s206 = sphi 0, %s203
    %s207 = sphi 0, %s206
    %s223 = sphi 0, %s207
  $region4: #{vqvae_forward.1} parent=0 // loop_header_branch
    %18 = sbr.rel (%p16) target = $region8
  $region5: #{vqvae_forward.1} parent=0 // loop_body
    %s20 = ssub.s32 %s15, 1
    %s21 = ssub.s32 %s15, 2
    %s22 = sadd.s32 %s15, 1
    %s23 = ssub.s32 %s15, %s22
    %p24 = scmp.eq.s32.totalorder %s23, 0
    %s26 = sadd.s32 %s25, 1
    %s27 = scalar_select %p24, %s25, %s26
    %p30 = pneg %p24
    %p31 = scmp.eq.s32.totalorder %s15, 1
    %p32 = por %p30, %p31
    %p33 = scmp.ne.s32.totalorder %s25, %s28
    %p34 = scmp.eq.s32.totalorder %s15, 0
    %p35 = por %p33, %p34
    %p36 = scmp.ne.s32.totalorder %s25, %s28
    %p37 = scmp.eq.s32.totalorder %s20, 1
    %p38 = por %p36, %p37
    %p39 = scmp.ne.s32.totalorder %s28, %s29
    %p40 = scmp.eq.s32.totalorder %s20, 0
    %p41 = por %p39, %p40
    %p42 = scmp.ne.s32.totalorder %s28, %s29
    %p43 = scmp.eq.s32.totalorder %s21, 1
    %p44 = por %p42, %p43
    %p46 = scmp.ne.s32.totalorder %s29, %s45
    %p47 = scmp.eq.s32.totalorder %s21, 0
    %p48 = por %p46, %p47
    %s50 = sadd.s32 %s49, 1
    %p53 = scmp.eq.s32.totalorder %s15, 1
    %p54 = scmp.ne.s32.totalorder %s49, %s51
    %p55 = scmp.eq.s32.totalorder %s15, 0
    %p56 = por %p54, %p55
    %p57 = scmp.ne.s32.totalorder %s49, %s51
    %p58 = scmp.eq.s32.totalorder %s20, 1
    %p59 = por %p57, %p58
    %p60 = scmp.ne.s32.totalorder %s51, %s52
    %p61 = scmp.eq.s32.totalorder %s20, 0
    %p62 = por %p60, %p61
    %p63 = scmp.ne.s32.totalorder %s51, %s52
    %p64 = scmp.eq.s32.totalorder %s21, 1
    %p65 = por %p63, %p64
    %p67 = scmp.ne.s32.totalorder %s52, %s66
    %p68 = scmp.eq.s32.totalorder %s21, 0
    %p69 = por %p67, %p68
    %s71 = sadd.s32 %s70, 1
    %p74 = scmp.eq.s32.totalorder %s15, 1
    %p75 = scmp.ne.s32.totalorder %s70, %s72
    %p76 = scmp.eq.s32.totalorder %s15, 0
    %p77 = por %p75, %p76
    %p78 = scmp.ne.s32.totalorder %s70, %s72
    %p79 = scmp.eq.s32.totalorder %s20, 1
    %p80 = por %p78, %p79
    %p81 = scmp.ne.s32.totalorder %s72, %s73
    %p82 = scmp.eq.s32.totalorder %s20, 0
    %p83 = por %p81, %p82
    %p84 = scmp.ne.s32.totalorder %s72, %s73
    %p85 = scmp.eq.s32.totalorder %s21, 1
    %p86 = por %p84, %p85
    %p88 = scmp.ne.s32.totalorder %s73, %s87
    %p89 = scmp.eq.s32.totalorder %s21, 0
    %p90 = por %p88, %p89
    %s92 = sadd.s32 %s91, 1
    %p95 = scmp.eq.s32.totalorder %s15, 1
    %p96 = scmp.ne.s32.totalorder %s91, %s93
    %p97 = scmp.eq.s32.totalorder %s15, 0
    %p98 = por %p96, %p97
    %p99 = scmp.ne.s32.totalorder %s91, %s93
    %p100 = scmp.eq.s32.totalorder %s20, 1
    %p101 = por %p99, %p100
    %p102 = scmp.ne.s32.totalorder %s93, %s94
    %p103 = scmp.eq.s32.totalorder %s20, 0
    %p104 = por %p102, %p103
    %p105 = scmp.ne.s32.totalorder %s93, %s94
    %p106 = scmp.eq.s32.totalorder %s21, 1
    %p107 = por %p105, %p106
    %p109 = scmp.ne.s32.totalorder %s94, %s108
    %p110 = scmp.eq.s32.totalorder %s21, 0
    %p111 = por %p109, %p110
    %s113 = sadd.s32 %s112, 1
    %p116 = scmp.eq.s32.totalorder %s15, 1
    %p117 = scmp.ne.s32.totalorder %s112, %s114
    %p118 = scmp.eq.s32.totalorder %s15, 0
    %p119 = por %p117, %p118
    %p120 = scmp.ne.s32.totalorder %s112, %s114
    %p121 = scmp.eq.s32.totalorder %s20, 1
    %p122 = por %p120, %p121
    %p123 = scmp.ne.s32.totalorder %s114, %s115
    %p124 = scmp.eq.s32.totalorder %s20, 0
    %p125 = por %p123, %p124
    %p126 = scmp.ne.s32.totalorder %s114, %s115
    %p127 = scmp.eq.s32.totalorder %s21, 1
    %p128 = por %p126, %p127
    %p130 = scmp.ne.s32.totalorder %s115, %s129
    %p131 = scmp.eq.s32.totalorder %s21, 0
    %p132 = por %p130, %p131
    %s134 = sadd.s32 %s133, 1
    %p137 = scmp.eq.s32.totalorder %s15, 1
    %p138 = scmp.ne.s32.totalorder %s133, %s135
    %p139 = scmp.eq.s32.totalorder %s15, 0
    %p140 = por %p138, %p139
    %p141 = scmp.ne.s32.totalorder %s133, %s135
    %p142 = scmp.eq.s32.totalorder %s20, 1
    %p143 = por %p141, %p142
    %p144 = scmp.ne.s32.totalorder %s135, %s136
    %p145 = scmp.eq.s32.totalorder %s20, 0
    %p146 = por %p144, %p145
    %p147 = scmp.ne.s32.totalorder %s135, %s136
    %p148 = scmp.eq.s32.totalorder %s21, 1
    %p149 = por %p147, %p148
    %p151 = scmp.ne.s32.totalorder %s136, %s150
    %p152 = scmp.eq.s32.totalorder %s21, 0
    %p153 = por %p151, %p152
    %s155 = sadd.s32 %s154, 1
    %p158 = scmp.eq.s32.totalorder %s15, 1
    %p159 = scmp.ne.s32.totalorder %s154, %s156
    %p160 = scmp.eq.s32.totalorder %s15, 0
    %p161 = por %p159, %p160
    %p162 = scmp.ne.s32.totalorder %s154, %s156
    %p163 = scmp.eq.s32.totalorder %s20, 1
    %p164 = por %p162, %p163
    %p165 = scmp.ne.s32.totalorder %s156, %s157
    %p166 = scmp.eq.s32.totalorder %s20, 0
    %p167 = por %p165, %p166
    %p168 = scmp.ne.s32.totalorder %s156, %s157
    %p169 = scmp.eq.s32.totalorder %s21, 1
    %p170 = por %p168, %p169
    %p172 = scmp.ne.s32.totalorder %s157, %s171
    %p173 = scmp.eq.s32.totalorder %s21, 0
    %p174 = por %p172, %p173
    %s175 = ssub.s32 %s15, %s22
    %p176 = scmp.eq.s32.totalorder %s175, 0
    %s178 = sadd.s32 %s177, 1
    %s179 = scalar_select %p176, %s177, %s178
    %p182 = pneg %p176
    %p183 = scmp.eq.s32.totalorder %s15, 1
    %p184 = por %p182, %p183
    %p185 = scmp.ne.s32.totalorder %s177, %s180
    %p186 = scmp.eq.s32.totalorder %s15, 0
    %p187 = por %p185, %p186
    %p188 = scmp.ne.s32.totalorder %s177, %s180
    %p189 = scmp.eq.s32.totalorder %s20, 1
    %p190 = por %p188, %p189
    %p191 = scmp.ne.s32.totalorder %s180, %s181
    %p192 = scmp.eq.s32.totalorder %s20, 0
    %p193 = por %p191, %p192
    %p194 = scmp.ne.s32.totalorder %s180, %s181
    %p195 = scmp.eq.s32.totalorder %s21, 1
    %p196 = por %p194, %p195
    %p198 = scmp.ne.s32.totalorder %s181, %s197
    %p199 = scmp.eq.s32.totalorder %s21, 0
    %p200 = por %p198, %p199
    %s201 = ssub.s32 %s15, %s22
    %p202 = scmp.eq.s32.totalorder %s201, 0
    %s204 = sadd.s32 %s203, 1
    %s205 = scalar_select %p202, %s203, %s204
    %p208 = pneg %p202
    %p209 = scmp.eq.s32.totalorder %s15, 1
    %p210 = por %p208, %p209
    %p211 = scmp.ne.s32.totalorder %s203, %s206
    %p212 = scmp.eq.s32.totalorder %s15, 0
    %p213 = por %p211, %p212
    %p214 = scmp.ne.s32.totalorder %s203, %s206
    %p215 = scmp.eq.s32.totalorder %s20, 1
    %p216 = por %p214, %p215
    %p217 = scmp.ne.s32.totalorder %s206, %s207
    %p218 = scmp.eq.s32.totalorder %s20, 0
    %p219 = por %p217, %p218
    %p220 = scmp.ne.s32.totalorder %s206, %s207
    %p221 = scmp.eq.s32.totalorder %s21, 1
    %p222 = por %p220, %p221
    %p224 = scmp.ne.s32.totalorder %s207, %s223
    %p225 = scmp.eq.s32.totalorder %s21, 0
    %p226 = por %p224, %p225
    %p227 = scmp.le.s32.totalorder 1, %s15
    %p228 = scmp.lt.s32.totalorder %s15, 3
    %p229 = pnand %p227, %p228
    %p230 = pneg %p229
    // Predicated region
    $region9: #{vqvae_forward.1} parent=5 // pred_check
      _
    $region10: #{vqvae_forward.1} parent=5 // pred_check_branch
      %232 = sbr.rel (%p229) target = $region12
    $region11: #{vqvae_forward.1} parent=5 // pred_region
      %s233 = ssub.s32 %s15, 1
      // Predicated region
      $region13: #{vqvae_forward.1} parent=11 // pred_check
        %p234 = pneg %p62
      $region14: #{vqvae_forward.1} parent=11 // pred_check_branch
        %236 = sbr.rel (%p234) target = $region16
      $region15: #{vqvae_forward.1} parent=11 // pred_region
        _
      $region16: #{vqvae_forward.1} parent=11 // pred_fallthru
        _
      // Predicated region
      $region17: #{vqvae_forward.1} parent=11 // pred_check
        %p237 = pneg %p83
      $region18: #{vqvae_forward.1} parent=11 // pred_check_branch
        %239 = sbr.rel (%p237) target = $region20
      $region19: #{vqvae_forward.1} parent=11 // pred_region
        _
      $region20: #{vqvae_forward.1} parent=11 // pred_fallthru
        _
      // Predicated region
      $region21: #{vqvae_forward.1} parent=11 // pred_check
        %p240 = pneg %p104
      $region22: #{vqvae_forward.1} parent=11 // pred_check_branch
        %242 = sbr.rel (%p240) target = $region24
      $region23: #{vqvae_forward.1} parent=11 // pred_region
        _
      $region24: #{vqvae_forward.1} parent=11 // pred_fallthru
        _
      // Predicated region
      $region25: #{vqvae_forward.1} parent=11 // pred_check
        %p243 = pneg %p125
      $region26: #{vqvae_forward.1} parent=11 // pred_check_branch
        %245 = sbr.rel (%p243) target = $region28
      $region27: #{vqvae_forward.1} parent=11 // pred_region
        _
      $region28: #{vqvae_forward.1} parent=11 // pred_fallthru
        _
      // Predicated region
      $region29: #{vqvae_forward.1} parent=11 // pred_check
        %p246 = pneg %p146
      $region30: #{vqvae_forward.1} parent=11 // pred_check_branch
        %248 = sbr.rel (%p246) target = $region32
      $region31: #{vqvae_forward.1} parent=11 // pred_region
        _
      $region32: #{vqvae_forward.1} parent=11 // pred_fallthru
        _
      // Predicated region
      $region33: #{vqvae_forward.1} parent=11 // pred_check
        %p249 = pneg %p167
      $region34: #{vqvae_forward.1} parent=11 // pred_check_branch
        %251 = sbr.rel (%p249) target = $region36
      $region35: #{vqvae_forward.1} parent=11 // pred_region
        _
      $region36: #{vqvae_forward.1} parent=11 // pred_fallthru
        _
    $region12: #{vqvae_forward.1} parent=5 // pred_fallthru
      _
    %p252 = scmp.lt.s32.totalorder %s15, 2
    // Predicated region
    $region37: #{vqvae_forward.1} parent=5 // pred_check
      %p253 = pneg %p252
    $region38: #{vqvae_forward.1} parent=5 // pred_check_branch
      %255 = sbr.rel (%p253) target = $region40
    $region39: #{vqvae_forward.1} parent=5 // pred_region
      // Predicated region
      $region41: #{vqvae_forward.1} parent=39 // pred_check
        %p256 = pneg %p35
      $region42: #{vqvae_forward.1} parent=39 // pred_check_branch
        %258 = sbr.rel (%p256) target = $region44
      $region43: #{vqvae_forward.1} parent=39 // pred_region
        %s259 = smul.u32 32, %s15
        %p260 = scmp.lt.s32.totalorder %s259, 63
        %s261 = scalar_select %p260, %s259, 63
        %s262 = smul.addr %s261, 8
        %s263 = scalar_lea.vmem %s0, %s262
        %s264 = smul.u32 32, %s15
      $region44: #{vqvae_forward.1} parent=39 // pred_fallthru
        _
    $region40: #{vqvae_forward.1} parent=5 // pred_fallthru
      _
    %p265 = scmp.le.s32.totalorder 1, %s15
    %p266 = scmp.lt.s32.totalorder %s15, 3
    %p267 = pnand %p265, %p266
    %p268 = pneg %p267
    // Predicated region
    $region45: #{vqvae_forward.1} parent=5 // pred_check
      _
    $region46: #{vqvae_forward.1} parent=5 // pred_check_branch
      %270 = sbr.rel (%p267) target = $region48
    $region47: #{vqvae_forward.1} parent=5 // pred_region
      %s271 = ssub.s32 %s15, 1
      %s272 = smul.u32 32, %s20
      %p273 = scmp.lt.s32.totalorder %s272, 63
      %s274 = scalar_select %p273, %s272, 63
      %s275 = smul.addr %s274, 8
      %s276 = scalar_lea.vmem %s0, %s275
      %p277 = pneg %p41
      %p278 = pneg %p38
      %p279 = pneg %p62
      %p280 = pneg %p59
      %p281 = pneg %p83
      %p282 = pneg %p80
      %p283 = pneg %p104
      %p284 = pneg %p101
      %p285 = pneg %p125
      %p286 = pneg %p122
      %p287 = pneg %p146
      %p288 = pneg %p143
      %p289 = pneg %p167
      %p290 = pneg %p164
      %p291 = pneg %p193
      %p292 = pneg %p190
      %s293 = smul.u32 32, %s20
      %p294 = scmp.lt.s32.totalorder %s293, 63
      %s295 = scalar_select %p294, %s293, 63
      %s296 = smul.addr %s295, 8
      %s297 = scalar_lea.vmem %s7, %s296
      %p298 = pneg %p219
      %p299 = pneg %p216
      %p300 = scmp.lt.s32.totalorder %s20, 1
      %s301 = scalar_select %p300, %s20, 1
      %s302 = scalar_lea.vmem %s8, %s301
      %s303 = smul.u32 32, %s20
      %p304 = scmp.lt.s32.totalorder %s303, 63
      %s305 = scalar_select %p304, %s303, 63
      %s306 = smul.addr %s305, 8
      %s307 = scalar_lea.vmem %s0, %s306
      %s308 = smul.u32 32, %s20
      %s309 = smul.u32 32, %s20
      %p310 = scmp.lt.s32.totalorder %s309, 63
      %s311 = scalar_select %p310, %s309, 63
      %s312 = smul.addr %s311, 8
      %s313 = scalar_lea.vmem %s7, %s312
      %s314 = smul.u32 32, %s20
      %p315 = scmp.lt.s32.totalorder %s20, 1
      %s316 = scalar_select %p315, %s20, 1
      %s317 = scalar_lea.vmem %s8, %s316
      %v318 = vld [vmem:[%s307] sm:$0xff]
      %v319 = vld [vmem:[%s307 + $0x8] sm:$0xff]
      %v320 = vld [vmem:[%s307 + $0x10] sm:$0xff]
      %v321 = vld [vmem:[%s307 + $0x18] sm:$0xff]
      %v322 = vld [vmem:[%s307 + $0x20] sm:$0xff]
      %v323 = vld [vmem:[%s307 + $0x28] sm:$0xff]
      %v324 = vld [vmem:[%s307 + $0x30] sm:$0xff]
      %v325 = vld [vmem:[%s307 + $0x38] sm:$0xff]
      %v326 = vld [vmem:[%s307 + $0x40] sm:$0xff]
      %v327 = vld [vmem:[%s307 + $0x48] sm:$0xff]
      %v328 = vld [vmem:[%s307 + $0x50] sm:$0xff]
      %v329 = vld [vmem:[%s307 + $0x58] sm:$0xff]
      %v330 = vld [vmem:[%s307 + $0x60] sm:$0xff]
      %v331 = vld [vmem:[%s307 + $0x68] sm:$0xff]
      %v332 = vld [vmem:[%s307 + $0x70] sm:$0xff]
      %v333 = vld [vmem:[%s307 + $0x78] sm:$0xff]
      %v334 = vld [vmem:[%s307 + $0x80] sm:$0xff]
      %v335 = vld [vmem:[%s307 + $0x88] sm:$0xff]
      %v336 = vld [vmem:[%s307 + $0x90] sm:$0xff]
      %v337 = vld [vmem:[%s307 + $0x98] sm:$0xff]
      %v338 = vld [vmem:[%s307 + $0xa0] sm:$0xff]
      %v339 = vld [vmem:[%s307 + $0xa8] sm:$0xff]
      %v340 = vld [vmem:[%s307 + $0xb0] sm:$0xff]
      %v341 = vld [vmem:[%s307 + $0xb8] sm:$0xff]
      %v342 = vld [vmem:[%s307 + $0xc0] sm:$0xff]
      %v343 = vld [vmem:[%s307 + $0xc8] sm:$0xff]
      %v344 = vld [vmem:[%s307 + $0xd0] sm:$0xff]
      %v345 = vld [vmem:[%s307 + $0xd8] sm:$0xff]
      %v346 = vld [vmem:[%s307 + $0xe0] sm:$0xff]
      %v347 = vld [vmem:[%s307 + $0xe8] sm:$0xff]
      %v348 = vld [vmem:[%s307 + $0xf0] sm:$0xff]
      %v349 = vld [vmem:[%s307 + $0xf8] sm:$0xff]
      %v350 = vld [vmem:[%s1] sm:$0xff]
      %v351 = vld [vmem:[%s1 + $0x8] sm:$0xff]
      %v352 = vld [vmem:[%s2] sm:$0x1]
      %v354 = vlaneseq
      %v355 = vshrl.u32 %v354, 7
      %v356 = vsub.s32 0, %v355
      %v357 = vrot.slane %v352, %v356
      %vm359 = vcmask 130048
      %v361 = vsel %vm359, %v318, 0
      %v364 = vsel %vm359, %v319, 0
      %v367 = vsel %vm359, %v320, 0
      %v370 = vsel %vm359, %v321, 0
      %v373 = vsel %vm359, %v322, 0
      %v376 = vsel %vm359, %v323, 0
      %v379 = vsel %vm359, %v324, 0
      %v382 = vsel %vm359, %v325, 0
      %v385 = vsel %vm359, %v326, 0
      %v388 = vsel %vm359, %v327, 0
      %v391 = vsel %vm359, %v328, 0
      %v394 = vsel %vm359, %v329, 0
      %v397 = vsel %vm359, %v330, 0
      %v400 = vsel %vm359, %v331, 0
      %v403 = vsel %vm359, %v332, 0
      %v406 = vsel %vm359, %v333, 0
      %v409 = vsel %vm359, %v334, 0
      %v412 = vsel %vm359, %v335, 0
      %v415 = vsel %vm359, %v336, 0
      %v418 = vsel %vm359, %v337, 0
      %v421 = vsel %vm359, %v338, 0
      %v424 = vsel %vm359, %v339, 0
      %v427 = vsel %vm359, %v340, 0
      %v430 = vsel %vm359, %v341, 0
      %v433 = vsel %vm359, %v342, 0
      %v436 = vsel %vm359, %v343, 0
      %v439 = vsel %vm359, %v344, 0
      %v442 = vsel %vm359, %v345, 0
      %v445 = vsel %vm359, %v346, 0
      %v448 = vsel %vm359, %v347, 0
      %v451 = vsel %vm359, %v348, 0
      %v454 = vsel %vm359, %v349, 0
      %456 = vmatprep.subr.mxu0 0.0
      %457 = vmatpush1.msra.mxu0 %v350
      %458 = vmatprep.subr.mxu0 0.0
      %459 = vmatpush1.msra.mxu0 %v351
      %460 = vmatprep.subr.mxu0 0.0
      %461 = vmatpush1.msra.mxu0 0.0
      %462 = vmatprep.subr.mxu0 0.0
      %463 = vmatpush1.msra.mxu0 0.0
      %464 = vmatprep.subr.mxu0 0.0
      %465 = vmatpush1.msra.mxu0 0.0
      %466 = vmatprep.subr.mxu0 0.0
      %467 = vmatpush1.msra.mxu0 0.0
      %468 = vmatprep.subr.mxu0 0.0
      %469 = vmatpush1.msra.mxu0 0.0
      %470 = vmatprep.subr.mxu0 0.0
      %471 = vmatpush1.msra.mxu0 0.0
      %472 = vmatprep.subr.mxu0 0.0
      %473 = vmatpush1.msra.mxu0 0.0
      %474 = vmatprep.subr.mxu0 0.0
      %475 = vmatpush1.msra.mxu0 0.0
      %476 = vmatprep.subr.mxu0 0.0
      %477 = vmatpush1.msra.mxu0 0.0
      %478 = vmatprep.subr.mxu0 0.0
      %479 = vmatpush1.msra.mxu0 0.0
      %480 = vmatprep.subr.mxu0 0.0
      %481 = vmatpush1.msra.mxu0 0.0
      %482 = vmatprep.subr.mxu0 0.0
      %483 = vmatpush1.msra.mxu0 0.0
      %484 = vmatprep.subr.mxu0 0.0
      %485 = vmatpush1.msra.mxu0 0.0
      %486 = vmatprep.subr.mxu0 0.0
      %487 = vmatpush1.msra.mxu0 0.0
      %488 = vmatprep.subr.mxu0 0.0
      %489 = vmatpush1.msra.mxu0 0.0
      %490 = vmatprep.subr.mxu0 0.0
      %491 = vmatpush1.msra.mxu0 0.0
      %492 = vmatprep.subr.mxu0 0.0
      %493 = vmatpush1.msra.mxu0 0.0
      %494 = vmatprep.subr.mxu0 0.0
      %495 = vmatpush1.msra.mxu0 0.0
      %496 = vmatprep.subr.mxu0 0.0
      %497 = vmatpush1.msra.mxu0 0.0
      %498 = vmatprep.subr.mxu0 0.0
      %499 = vmatpush1.msra.mxu0 0.0
      %500 = vmatprep.subr.mxu0 0.0
      %501 = vmatpush1.msra.mxu0 0.0
      %502 = vmatprep.subr.mxu0 0.0
      %503 = vmatpush1.msra.mxu0 0.0
      %504 = vmatprep.subr.mxu0 0.0
      %505 = vmatpush1.msra.mxu0 0.0
      %506 = vmatprep.subr.mxu0 0.0
      %507 = vmatpush1.msra.mxu0 0.0
      %508 = vmatprep.subr.mxu0 0.0
      %509 = vmatpush1.msra.mxu0 0.0
      %510 = vmatprep.subr.mxu0 0.0
      %511 = vmatpush1.msra.mxu0 0.0
      %512 = vmatprep.subr.mxu0 0.0
      %513 = vmatpush1.msra.mxu0 0.0
      %514 = vmatprep.subr.mxu0 0.0
      %515 = vmatpush1.msra.mxu0 0.0
      %516 = vmatprep.subr.mxu0 0.0
      %517 = vmatpush1.msra.mxu0 0.0
      %518 = vmatprep.subr.mxu0 0.0
      %519 = vmatpush1.msra.mxu0 0.0
      %520 = vmatprep.mubr.f32.mxu0 0.0
      %521 = vmatmul.mubr.f32.gmra.mrb[0].mxu0 %v361
      %v522 = vpop.f32.mrb[0].mxu0
      %v523 = vadd.f32 %v357, %v522
      %v524 = vpop.f32.mrb[0].mxu0
      %525 = vmatprep.mubr.f32.mxu0 0.0
      %526 = vmatmul.mubr.f32.gmra.mrb[0].mxu0 %v364
      %v527 = vpop.f32.mrb[0].mxu0
      %v528 = vadd.f32 %v357, %v527
      %v529 = vpop.f32.mrb[0].mxu0
      %530 = vmatprep.mubr.f32.mxu0 0.0
      %531 = vmatmul.mubr.f32.gmra.mrb[0].mxu0 %v367
      %v532 = vpop.f32.mrb[0].mxu0
      %v533 = vadd.f32 %v357, %v532
      %v534 = vpop.f32.mrb[0].mxu0
      %535 = vmatprep.mubr.f32.mxu0 0.0
      %536 = vmatmul.mubr.f32.gmra.mrb[0].mxu0 %v370
      %v537 = vpop.f32.mrb[0].mxu0
      %v538 = vadd.f32 %v357, %v537
      %v539 = vpop.f32.mrb[0].mxu0
      %540 = vmatprep.mubr.f32.mxu0 0.0
      %541 = vmatmul.mubr.f32.gmra.mrb[0].mxu0 %v373
      %v542 = vpop.f32.mrb[0].mxu0
      %v543 = vadd.f32 %v357, %v542
      %v544 = vpop.f32.mrb[0].mxu0
      %545 = vmatprep.mubr.f32.mxu0 0.0
      %546 = vmatmul.mubr.f32.gmra.mrb[0].mxu0 %v376
      %v547 = vpop.f32.mrb[0].mxu0
      %v548 = vadd.f32 %v357, %v547
      %v549 = vpop.f32.mrb[0].mxu0
      %550 = vmatprep.mubr.f32.mxu0 0.0
      %551 = vmatmul.mubr.f32.gmra.mrb[0].mxu0 %v379
      %v552 = vpop.f32.mrb[0].mxu0
      %v553 = vadd.f32 %v357, %v552
      %v554 = vpop.f32.mrb[0].mxu0
      %555 = vmatprep.mubr.f32.mxu0 0.0
      %556 = vmatmul.mubr.f32.gmra.mrb[0].mxu0 %v382
      %v557 = vpop.f32.mrb[0].mxu0
      %v558 = vadd.f32 %v357, %v557
      %v559 = vpop.f32.mrb[0].mxu0
      %560 = vmatprep.mubr.f32.mxu0 0.0
      %561 = vmatmul.mubr.f32.gmra.mrb[0].mxu0 %v385
      %v562 = vpop.f32.mrb[0].mxu0
      %v563 = vadd.f32 %v357, %v562
      %v564 = vpop.f32.mrb[0].mxu0
      %565 = vmatprep.mubr.f32.mxu0 0.0
      %566 = vmatmul.mubr.f32.gmra.mrb[0].mxu0 %v388
      %v567 = vpop.f32.mrb[0].mxu0
      %v568 = vadd.f32 %v357, %v567
      %v569 = vpop.f32.mrb[0].mxu0
      %570 = vmatprep.mubr.f32.mxu0 0.0
      %571 = vmatmul.mubr.f32.gmra.mrb[0].mxu0 %v391
      %v572 = vpop.f32.mrb[0].mxu0
      %v573 = vadd.f32 %v357, %v572
      %v574 = vpop.f32.mrb[0].mxu0
      %575 = vmatprep.mubr.f32.mxu0 0.0
      %576 = vmatmul.mubr.f32.gmra.mrb[0].mxu0 %v394
      %v577 = vpop.f32.mrb[0].mxu0
      %v578 = vadd.f32 %v357, %v577
      %v579 = vpop.f32.mrb[0].mxu0
      %580 = vmatprep.mubr.f32.mxu0 0.0
      %581 = vmatmul.mubr.f32.gmra.mrb[0].mxu0 %v397
      %v582 = vpop.f32.mrb[0].mxu0
      %v583 = vadd.f32 %v357, %v582
      %v584 = vpop.f32.mrb[0].mxu0
      %585 = vmatprep.mubr.f32.mxu0 0.0
      %586 = vmatmul.mubr.f32.gmra.mrb[0].mxu0 %v400
      %v587 = vpop.f32.mrb[0].mxu0
      %v588 = vadd.f32 %v357, %v587
      %v589 = vpop.f32.mrb[0].mxu0
      %590 = vmatprep.mubr.f32.mxu0 0.0
      %591 = vmatmul.mubr.f32.gmra.mrb[0].mxu0 %v403
      %v592 = vpop.f32.mrb[0].mxu0
      %v593 = vadd.f32 %v357, %v592
      %v594 = vpop.f32.mrb[0].mxu0
      %595 = vmatprep.mubr.f32.mxu0 0.0
      %596 = vmatmul.mubr.f32.gmra.mrb[0].mxu0 %v406
      %v597 = vpop.f32.mrb[0].mxu0
      %v598 = vadd.f32 %v357, %v597
      %v599 = vpop.f32.mrb[0].mxu0
      %600 = vmatprep.mubr.f32.mxu0 0.0
      %601 = vmatmul.mubr.f32.gmra.mrb[0].mxu0 %v409
      %v602 = vpop.f32.mrb[0].mxu0
      %v603 = vadd.f32 %v357, %v602
      %v604 = vpop.f32.mrb[0].mxu0
      %605 = vmatprep.mubr.f32.mxu0 0.0
      %606 = vmatmul.mubr.f32.gmra.mrb[0].mxu0 %v412
      %v607 = vpop.f32.mrb[0].mxu0
      %v608 = vadd.f32 %v357, %v607
      %v609 = vpop.f32.mrb[0].mxu0
      %610 = vmatprep.mubr.f32.mxu0 0.0
      %611 = vmatmul.mubr.f32.gmra.mrb[0].mxu0 %v415
      %v612 = vpop.f32.mrb[0].mxu0
      %v613 = vadd.f32 %v357, %v612
      %v614 = vpop.f32.mrb[0].mxu0
      %615 = vmatprep.mubr.f32.mxu0 0.0
      %616 = vmatmul.mubr.f32.gmra.mrb[0].mxu0 %v418
      %v617 = vpop.f32.mrb[0].mxu0
      %v618 = vadd.f32 %v357, %v617
      %v619 = vpop.f32.mrb[0].mxu0
      %620 = vmatprep.mubr.f32.mxu0 0.0
      %621 = vmatmul.mubr.f32.gmra.mrb[0].mxu0 %v421
      %v622 = vpop.f32.mrb[0].mxu0
      %v623 = vadd.f32 %v357, %v622
      %v624 = vpop.f32.mrb[0].mxu0
      %625 = vmatprep.mubr.f32.mxu0 0.0
      %626 = vmatmul.mubr.f32.gmra.mrb[0].mxu0 %v424
      %v627 = vpop.f32.mrb[0].mxu0
      %v628 = vadd.f32 %v357, %v627
      %v629 = vpop.f32.mrb[0].mxu0
      %630 = vmatprep.mubr.f32.mxu0 0.0
      %631 = vmatmul.mubr.f32.gmra.mrb[0].mxu0 %v427
      %v632 = vpop.f32.mrb[0].mxu0
      %v633 = vadd.f32 %v357, %v632
      %v634 = vpop.f32.mrb[0].mxu0
      %635 = vmatprep.mubr.f32.mxu0 0.0
      %636 = vmatmul.mubr.f32.gmra.mrb[0].mxu0 %v430
      %v637 = vpop.f32.mrb[0].mxu0
      %v638 = vadd.f32 %v357, %v637
      %v639 = vpop.f32.mrb[0].mxu0
      %640 = vmatprep.mubr.f32.mxu0 0.0
      %641 = vmatmul.mubr.f32.gmra.mrb[0].mxu0 %v433
      %v642 = vpop.f32.mrb[0].mxu0
      %v643 = vadd.f32 %v357, %v642
      %v644 = vpop.f32.mrb[0].mxu0
      %645 = vmatprep.mubr.f32.mxu0 0.0
      %646 = vmatmul.mubr.f32.gmra.mrb[0].mxu0 %v436
      %v647 = vpop.f32.mrb[0].mxu0
      %v648 = vadd.f32 %v357, %v647
      %v649 = vpop.f32.mrb[0].mxu0
      %650 = vmatprep.mubr.f32.mxu0 0.0
      %651 = vmatmul.mubr.f32.gmra.mrb[0].mxu0 %v439
      %v652 = vpop.f32.mrb[0].mxu0
      %v653 = vadd.f32 %v357, %v652
      %v654 = vpop.f32.mrb[0].mxu0
      %655 = vmatprep.mubr.f32.mxu0 0.0
      %656 = vmatmul.mubr.f32.gmra.mrb[0].mxu0 %v442
      %v657 = vpop.f32.mrb[0].mxu0
      %v658 = vadd.f32 %v357, %v657
      %v659 = vpop.f32.mrb[0].mxu0
      %660 = vmatprep.mubr.f32.mxu0 0.0
      %661 = vmatmul.mubr.f32.gmra.mrb[0].mxu0 %v445
      %v662 = vpop.f32.mrb[0].mxu0
      %v663 = vadd.f32 %v357, %v662
      %v664 = vpop.f32.mrb[0].mxu0
      %665 = vmatprep.mubr.f32.mxu0 0.0
      %666 = vmatmul.mubr.f32.gmra.mrb[0].mxu0 %v448
      %v667 = vpop.f32.mrb[0].mxu0
      %v668 = vadd.f32 %v357, %v667
      %v669 = vpop.f32.mrb[0].mxu0
      %670 = vmatprep.mubr.f32.mxu0 0.0
      %671 = vmatmul.mubr.f32.gmra.mrb[0].mxu0 %v451
      %v672 = vpop.f32.mrb[0].mxu0
      %v673 = vadd.f32 %v357, %v672
      %v674 = vpop.f32.mrb[0].mxu0
      %675 = vmatprep.mubr.f32.mxu0 0.0
      %676 = vmatmul.mubr.f32.gmra.mrb[0].mxu0 %v454
      %v677 = vpop.f32.mrb[0].mxu0
      %v678 = vadd.f32 %v357, %v677
      %v679 = vpop.f32.mrb[0].mxu0
      %680 = vdwg.mxu0
      %v681 = vld [vmem:[%s3] sm:$0xff]
      %v682 = vld [vmem:[%s3 + $0x8] sm:$0xff]
      %v683 = vld [vmem:[%s4] sm:$0x1]
      %v685 = vlaneseq
      %v686 = vshrl.u32 %v685, 7
      %v687 = vsub.s32 0, %v686
      %v688 = vrot.slane %v683, %v687
      %690 = vmatprep.subr.mxu0 0.0
      %691 = vmatpush1.msra.mxu0 %v681
      %692 = vmatprep.subr.mxu0 0.0
      %693 = vmatpush1.msra.mxu0 %v682
      %694 = vmatprep.subr.mxu0 0.0
      %695 = vmatpush1.msra.mxu0 0.0
      %696 = vmatprep.subr.mxu0 0.0
      %697 = vmatpush1.msra.mxu0 0.0
      %698 = vmatprep.subr.mxu0 0.0
      %699 = vmatpush1.msra.mxu0 0.0
      %700 = vmatprep.subr.mxu0 0.0
      %701 = vmatpush1.msra.mxu0 0.0
      %702 = vmatprep.subr.mxu0 0.0
      %703 = vmatpush1.msra.mxu0 0.0
      %704 = vmatprep.subr.mxu0 0.0
      %705 = vmatpush1.msra.mxu0 0.0
      %706 = vmatprep.subr.mxu0 0.0
      %707 = vmatpush1.msra.mxu0 0.0
      %708 = vmatprep.subr.mxu0 0.0
      %709 = vmatpush1.msra.mxu0 0.0
      %710 = vmatprep.subr.mxu0 0.0
      %711 = vmatpush1.msra.mxu0 0.0
      %712 = vmatprep.subr.mxu0 0.0
      %713 = vmatpush1.msra.mxu0 0.0
      %714 = vmatprep.subr.mxu0 0.0
      %715 = vmatpush1.msra.mxu0 0.0
      %716 = vmatprep.subr.mxu0 0.0
      %717 = vmatpush1.msra.mxu0 0.0
      %718 = vmatprep.subr.mxu0 0.0
      %719 = vmatpush1.msra.mxu0 0.0
      %720 = vmatprep.subr.mxu0 0.0
      %721 = vmatpush1.msra.mxu0 0.0
      %722 = vmatprep.subr.mxu0 0.0
      %723 = vmatpush1.msra.mxu0 0.0
      %724 = vmatprep.subr.mxu0 0.0
      %725 = vmatpush1.msra.mxu0 0.0
      %726 = vmatprep.subr.mxu0 0.0
      %727 = vmatpush1.msra.mxu0 0.0
      %728 = vmatprep.subr.mxu0 0.0
      %729 = vmatpush1.msra.mxu0 0.0
      %730 = vmatprep.subr.mxu0 0.0
      %731 = vmatpush1.msra.mxu0 0.0
      %732 = vmatprep.subr.mxu0 0.0
      %733 = vmatpush1.msra.mxu0 0.0
      %734 = vmatprep.subr.mxu0 0.0
      %735 = vmatpush1.msra.mxu0 0.0
      %736 = vmatprep.subr.mxu0 0.0
      %737 = vmatpush1.msra.mxu0 0.0
      %738 = vmatprep.subr.mxu0 0.0
      %739 = vmatpush1.msra.mxu0 0.0
      %740 = vmatprep.subr.mxu0 0.0
      %741 = vmatpush1.msra.mxu0 0.0
      %742 = vmatprep.subr.mxu0 0.0
      %743 = vmatpush1.msra.mxu0 0.0
      %744 = vmatprep.subr.mxu0 0.0
      %745 = vmatpush1.msra.mxu0 0.0
      %746 = vmatprep.subr.mxu0 0.0
      %747 = vmatpush1.msra.mxu0 0.0
      %748 = vmatprep.subr.mxu0 0.0
      %749 = vmatpush1.msra.mxu0 0.0
      %750 = vmatprep.subr.mxu0 0.0
      %751 = vmatpush1.msra.mxu0 0.0
      %752 = vmatprep.subr.mxu0 0.0
      %753 = vmatpush1.msra.mxu0 0.0
      %754 = vmatprep.mubr.f32.mxu0 0.0
      %755 = vmatmul.mubr.f32.gmra.mrb[0].mxu0 %v361
      %v756 = vpop.f32.mrb[0].mxu0
      %v757 = vadd.f32 %v688, %v756
      %v758 = vpop.f32.mrb[0].mxu0
      %759 = vmatprep.mubr.f32.mxu0 0.0
      %760 = vmatmul.mubr.f32.gmra.mrb[0].mxu0 %v364
      %v761 = vpop.f32.mrb[0].mxu0
      %v762 = vadd.f32 %v688, %v761
      %v763 = vpop.f32.mrb[0].mxu0
      %764 = vmatprep.mubr.f32.mxu0 0.0
      %765 = vmatmul.mubr.f32.gmra.mrb[0].mxu0 %v367
      %v766 = vpop.f32.mrb[0].mxu0
      %v767 = vadd.f32 %v688, %v766
      %v768 = vpop.f32.mrb[0].mxu0
      %769 = vmatprep.mubr.f32.mxu0 0.0
      %770 = vmatmul.mubr.f32.gmra.mrb[0].mxu0 %v370
      %v771 = vpop.f32.mrb[0].mxu0
      %v772 = vadd.f32 %v688, %v771
      %v773 = vpop.f32.mrb[0].mxu0
      %774 = vmatprep.mubr.f32.mxu0 0.0
      %775 = vmatmul.mubr.f32.gmra.mrb[0].mxu0 %v373
      %v776 = vpop.f32.mrb[0].mxu0
      %v777 = vadd.f32 %v688, %v776
      %v778 = vpop.f32.mrb[0].mxu0
      %779 = vmatprep.mubr.f32.mxu0 0.0
      %780 = vmatmul.mubr.f32.gmra.mrb[0].mxu0 %v376
      %v781 = vpop.f32.mrb[0].mxu0
      %v782 = vadd.f32 %v688, %v781
      %v783 = vpop.f32.mrb[0].mxu0
      %784 = vmatprep.mubr.f32.mxu0 0.0
      %785 = vmatmul.mubr.f32.gmra.mrb[0].mxu0 %v379
      %v786 = vpop.f32.mrb[0].mxu0
      %v787 = vadd.f32 %v688, %v786
      %v788 = vpop.f32.mrb[0].mxu0
      %789 = vmatprep.mubr.f32.mxu0 0.0
      %790 = vmatmul.mubr.f32.gmra.mrb[0].mxu0 %v382
      %v791 = vpop.f32.mrb[0].mxu0
      %v792 = vadd.f32 %v688, %v791
      %v793 = vpop.f32.mrb[0].mxu0
      %794 = vmatprep.mubr.f32.mxu0 0.0
      %795 = vmatmul.mubr.f32.gmra.mrb[0].mxu0 %v385
      %v796 = vpop.f32.mrb[0].mxu0
      %v797 = vadd.f32 %v688, %v796
      %v798 = vpop.f32.mrb[0].mxu0
      %799 = vmatprep.mubr.f32.mxu0 0.0
      %800 = vmatmul.mubr.f32.gmra.mrb[0].mxu0 %v388
      %v801 = vpop.f32.mrb[0].mxu0
      %v802 = vadd.f32 %v688, %v801
      %v803 = vpop.f32.mrb[0].mxu0
      %804 = vmatprep.mubr.f32.mxu0 0.0
      %805 = vmatmul.mubr.f32.gmra.mrb[0].mxu0 %v391
      %v806 = vpop.f32.mrb[0].mxu0
      %v807 = vadd.f32 %v688, %v806
      %v808 = vpop.f32.mrb[0].mxu0
      %809 = vmatprep.mubr.f32.mxu0 0.0
      %810 = vmatmul.mubr.f32.gmra.mrb[0].mxu0 %v394
      %v811 = vpop.f32.mrb[0].mxu0
      %v812 = vadd.f32 %v688, %v811
      %v813 = vpop.f32.mrb[0].mxu0
      %814 = vmatprep.mubr.f32.mxu0 0.0
      %815 = vmatmul.mubr.f32.gmra.mrb[0].mxu0 %v397
      %v816 = vpop.f32.mrb[0].mxu0
      %v817 = vadd.f32 %v688, %v816
      %v818 = vpop.f32.mrb[0].mxu0
      %819 = vmatprep.mubr.f32.mxu0 0.0
      %820 = vmatmul.mubr.f32.gmra.mrb[0].mxu0 %v400
      %v821 = vpop.f32.mrb[0].mxu0
      %v822 = vadd.f32 %v688, %v821
      %v823 = vpop.f32.mrb[0].mxu0
      %824 = vmatprep.mubr.f32.mxu0 0.0
      %825 = vmatmul.mubr.f32.gmra.mrb[0].mxu0 %v403
      %v826 = vpop.f32.mrb[0].mxu0
      %v827 = vadd.f32 %v688, %v826
      %v828 = vpop.f32.mrb[0].mxu0
      %829 = vmatprep.mubr.f32.mxu0 0.0
      %830 = vmatmul.mubr.f32.gmra.mrb[0].mxu0 %v406
      %v831 = vpop.f32.mrb[0].mxu0
      %v832 = vadd.f32 %v688, %v831
      %v833 = vpop.f32.mrb[0].mxu0
      %834 = vmatprep.mubr.f32.mxu0 0.0
      %835 = vmatmul.mubr.f32.gmra.mrb[0].mxu0 %v409
      %v836 = vpop.f32.mrb[0].mxu0
      %v837 = vadd.f32 %v688, %v836
      %v838 = vpop.f32.mrb[0].mxu0
      %839 = vmatprep.mubr.f32.mxu0 0.0
      %840 = vmatmul.mubr.f32.gmra.mrb[0].mxu0 %v412
      %v841 = vpop.f32.mrb[0].mxu0
      %v842 = vadd.f32 %v688, %v841
      %v843 = vpop.f32.mrb[0].mxu0
      %844 = vmatprep.mubr.f32.mxu0 0.0
      %845 = vmatmul.mubr.f32.gmra.mrb[0].mxu0 %v415
      %v846 = vpop.f32.mrb[0].mxu0
      %v847 = vadd.f32 %v688, %v846
      %v848 = vpop.f32.mrb[0].mxu0
      %849 = vmatprep.mubr.f32.mxu0 0.0
      %850 = vmatmul.mubr.f32.gmra.mrb[0].mxu0 %v418
      %v851 = vpop.f32.mrb[0].mxu0
      %v852 = vadd.f32 %v688, %v851
      %v853 = vpop.f32.mrb[0].mxu0
      %854 = vmatprep.mubr.f32.mxu0 0.0
      %855 = vmatmul.mubr.f32.gmra.mrb[0].mxu0 %v421
      %v856 = vpop.f32.mrb[0].mxu0
      %v857 = vadd.f32 %v688, %v856
      %v858 = vpop.f32.mrb[0].mxu0
      %859 = vmatprep.mubr.f32.mxu0 0.0
      %860 = vmatmul.mubr.f32.gmra.mrb[0].mxu0 %v424
      %v861 = vpop.f32.mrb[0].mxu0
      %v862 = vadd.f32 %v688, %v861
      %v863 = vpop.f32.mrb[0].mxu0
      %864 = vmatprep.mubr.f32.mxu0 0.0
      %865 = vmatmul.mubr.f32.gmra.mrb[0].mxu0 %v427
      %v866 = vpop.f32.mrb[0].mxu0
      %v867 = vadd.f32 %v688, %v866
      %v868 = vpop.f32.mrb[0].mxu0
      %869 = vmatprep.mubr.f32.mxu0 0.0
      %870 = vmatmul.mubr.f32.gmra.mrb[0].mxu0 %v430
      %v871 = vpop.f32.mrb[0].mxu0
      %v872 = vadd.f32 %v688, %v871
      %v873 = vpop.f32.mrb[0].mxu0
      %874 = vmatprep.mubr.f32.mxu0 0.0
      %875 = vmatmul.mubr.f32.gmra.mrb[0].mxu0 %v433
      %v876 = vpop.f32.mrb[0].mxu0
      %v877 = vadd.f32 %v688, %v876
      %v878 = vpop.f32.mrb[0].mxu0
      %879 = vmatprep.mubr.f32.mxu0 0.0
      %880 = vmatmul.mubr.f32.gmra.mrb[0].mxu0 %v436
      %v881 = vpop.f32.mrb[0].mxu0
      %v882 = vadd.f32 %v688, %v881
      %v883 = vpop.f32.mrb[0].mxu0
      %884 = vmatprep.mubr.f32.mxu0 0.0
      %885 = vmatmul.mubr.f32.gmra.mrb[0].mxu0 %v439
      %v886 = vpop.f32.mrb[0].mxu0
      %v887 = vadd.f32 %v688, %v886
      %v888 = vpop.f32.mrb[0].mxu0
      %889 = vmatprep.mubr.f32.mxu0 0.0
      %890 = vmatmul.mubr.f32.gmra.mrb[0].mxu0 %v442
      %v891 = vpop.f32.mrb[0].mxu0
      %v892 = vadd.f32 %v688, %v891
      %v893 = vpop.f32.mrb[0].mxu0
      %894 = vmatprep.mubr.f32.mxu0 0.0
      %895 = vmatmul.mubr.f32.gmra.mrb[0].mxu0 %v445
      %v896 = vpop.f32.mrb[0].mxu0
      %v897 = vadd.f32 %v688, %v896
      %v898 = vpop.f32.mrb[0].mxu0
      %899 = vmatprep.mubr.f32.mxu0 0.0
      %900 = vmatmul.mubr.f32.gmra.mrb[0].mxu0 %v448
      %v901 = vpop.f32.mrb[0].mxu0
      %v902 = vadd.f32 %v688, %v901
      %v903 = vpop.f32.mrb[0].mxu0
      %904 = vmatprep.mubr.f32.mxu0 0.0
      %905 = vmatmul.mubr.f32.gmra.mrb[0].mxu0 %v451
      %v906 = vpop.f32.mrb[0].mxu0
      %v907 = vadd.f32 %v688, %v906
      %v908 = vpop.f32.mrb[0].mxu0
      %909 = vmatprep.mubr.f32.mxu0 0.0
      %910 = vmatmul.mubr.f32.gmra.mrb[0].mxu0 %v454
      %v911 = vpop.f32.mrb[0].mxu0
      %v912 = vadd.f32 %v688, %v911
      %v913 = vpop.f32.mrb[0].mxu0
      %914 = vdwg.mxu0
      %915 = vmin.xlane.f32.xlu0 %v757
      %v916 = vpop.xlane.xlu0 %915
      %917 = vmin.xlane.f32.xlu0 %v762
      %v918 = vpop.xlane.xlu0 %917
      %919 = vmin.xlane.f32.xlu0 %v767
      %v920 = vpop.xlane.xlu0 %919
      %921 = vmin.xlane.f32.xlu0 %v772
      %v922 = vpop.xlane.xlu0 %921
      %923 = vmin.xlane.f32.xlu0 %v777
      %v924 = vpop.xlane.xlu0 %923
      %925 = vmin.xlane.f32.xlu0 %v782
      %v926 = vpop.xlane.xlu0 %925
      %927 = vmin.xlane.f32.xlu0 %v787
      %v928 = vpop.xlane.xlu0 %927
      %929 = vmin.xlane.f32.xlu0 %v792
      %v930 = vpop.xlane.xlu0 %929
      %931 = vmin.xlane.f32.xlu0 %v797
      %v932 = vpop.xlane.xlu0 %931
      %933 = vmin.xlane.f32.xlu0 %v802
      %v934 = vpop.xlane.xlu0 %933
      %935 = vmin.xlane.f32.xlu0 %v807
      %v936 = vpop.xlane.xlu0 %935
      %937 = vmin.xlane.f32.xlu0 %v812
      %v938 = vpop.xlane.xlu0 %937
      %939 = vmin.xlane.f32.xlu0 %v817
      %v940 = vpop.xlane.xlu0 %939
      %941 = vmin.xlane.f32.xlu0 %v822
      %v942 = vpop.xlane.xlu0 %941
      %943 = vmin.xlane.f32.xlu0 %v827
      %v944 = vpop.xlane.xlu0 %943
      %945 = vmin.xlane.f32.xlu0 %v832
      %v946 = vpop.xlane.xlu0 %945
      %947 = vmin.xlane.f32.xlu0 %v837
      %v948 = vpop.xlane.xlu0 %947
      %949 = vmin.xlane.f32.xlu0 %v842
      %v950 = vpop.xlane.xlu0 %949
      %951 = vmin.xlane.f32.xlu0 %v847
      %v952 = vpop.xlane.xlu0 %951
      %953 = vmin.xlane.f32.xlu0 %v852
      %v954 = vpop.xlane.xlu0 %953
      %955 = vmin.xlane.f32.xlu0 %v857
      %v956 = vpop.xlane.xlu0 %955
      %957 = vmin.xlane.f32.xlu0 %v862
      %v958 = vpop.xlane.xlu0 %957
      %959 = vmin.xlane.f32.xlu0 %v867
      %v960 = vpop.xlane.xlu0 %959
      %961 = vmin.xlane.f32.xlu0 %v872
      %v962 = vpop.xlane.xlu0 %961
      %963 = vmin.xlane.f32.xlu0 %v877
      %v964 = vpop.xlane.xlu0 %963
      %965 = vmin.xlane.f32.xlu0 %v882
      %v966 = vpop.xlane.xlu0 %965
      %967 = vmin.xlane.f32.xlu0 %v887
      %v968 = vpop.xlane.xlu0 %967
      %969 = vmin.xlane.f32.xlu0 %v892
      %v970 = vpop.xlane.xlu0 %969
      %971 = vmin.xlane.f32.xlu0 %v897
      %v972 = vpop.xlane.xlu0 %971
      %973 = vmin.xlane.f32.xlu0 %v902
      %v974 = vpop.xlane.xlu0 %973
      %975 = vmin.xlane.f32.xlu0 %v907
      %v976 = vpop.xlane.xlu0 %975
      %977 = vmin.xlane.f32.xlu0 %v912
      %v978 = vpop.xlane.xlu0 %977
      %v979 = vlaneseq
      %v980 = vand.u32 %v979, 127
      %vm981 = vcmp.eq.f32.partialorder %v757, %v916
      %vm982 = vcmp.eq.f32.partialorder %v762, %v918
      %vm983 = vcmp.eq.f32.partialorder %v767, %v920
      %vm984 = vcmp.eq.f32.partialorder %v772, %v922
      %vm985 = vcmp.eq.f32.partialorder %v777, %v924
      %vm986 = vcmp.eq.f32.partialorder %v782, %v926
      %vm987 = vcmp.eq.f32.partialorder %v787, %v928
      %vm988 = vcmp.eq.f32.partialorder %v792, %v930
      %vm989 = vcmp.eq.f32.partialorder %v797, %v932
      %vm990 = vcmp.eq.f32.partialorder %v802, %v934
      %vm991 = vcmp.eq.f32.partialorder %v807, %v936
      %vm992 = vcmp.eq.f32.partialorder %v812, %v938
      %vm993 = vcmp.eq.f32.partialorder %v817, %v940
      %vm994 = vcmp.eq.f32.partialorder %v822, %v942
      %vm995 = vcmp.eq.f32.partialorder %v827, %v944
      %vm996 = vcmp.eq.f32.partialorder %v832, %v946
      %vm997 = vcmp.eq.f32.partialorder %v837, %v948
      %vm998 = vcmp.eq.f32.partialorder %v842, %v950
      %vm999 = vcmp.eq.f32.partialorder %v847, %v952
      %vm1000 = vcmp.eq.f32.partialorder %v852, %v954
      %vm1001 = vcmp.eq.f32.partialorder %v857, %v956
      %vm1002 = vcmp.eq.f32.partialorder %v862, %v958
      %vm1003 = vcmp.eq.f32.partialorder %v867, %v960
      %vm1004 = vcmp.eq.f32.partialorder %v872, %v962
      %vm1005 = vcmp.eq.f32.partialorder %v877, %v964
      %vm1006 = vcmp.eq.f32.partialorder %v882, %v966
      %vm1007 = vcmp.eq.f32.partialorder %v887, %v968
      %vm1008 = vcmp.eq.f32.partialorder %v892, %v970
      %vm1009 = vcmp.eq.f32.partialorder %v897, %v972
      %vm1010 = vcmp.eq.f32.partialorder %v902, %v974
      %vm1011 = vcmp.eq.f32.partialorder %v907, %v976
      %vm1012 = vcmp.eq.f32.partialorder %v912, %v978
      %v1013 = vsel %vm981, %v980, 128
      %v1014 = vsel %vm982, %v980, 128
      %v1015 = vsel %vm983, %v980, 128
      %v1016 = vsel %vm984, %v980, 128
      %v1017 = vsel %vm985, %v980, 128
      %v1018 = vsel %vm986, %v980, 128
      %v1019 = vsel %vm987, %v980, 128
      %v1020 = vsel %vm988, %v980, 128
      %v1021 = vsel %vm989, %v980, 128
      %v1022 = vsel %vm990, %v980, 128
      %v1023 = vsel %vm991, %v980, 128
      %v1024 = vsel %vm992, %v980, 128
      %v1025 = vsel %vm993, %v980, 128
      %v1026 = vsel %vm994, %v980, 128
      %v1027 = vsel %vm995, %v980, 128
      %v1028 = vsel %vm996, %v980, 128
      %v1029 = vsel %vm997, %v980, 128
      %v1030 = vsel %vm998, %v980, 128
      %v1031 = vsel %vm999, %v980, 128
      %v1032 = vsel %vm1000, %v980, 128
      %v1033 = vsel %vm1001, %v980, 128
      %v1034 = vsel %vm1002, %v980, 128
      %v1035 = vsel %vm1003, %v980, 128
      %v1036 = vsel %vm1004, %v980, 128
      %v1037 = vsel %vm1005, %v980, 128
      %v1038 = vsel %vm1006, %v980, 128
      %v1039 = vsel %vm1007, %v980, 128
      %v1040 = vsel %vm1008, %v980, 128
      %v1041 = vsel %vm1009, %v980, 128
      %v1042 = vsel %vm1010, %v980, 128
      %v1043 = vsel %vm1011, %v980, 128
      %v1044 = vsel %vm1012, %v980, 128
      %v1045 = vand.u32 %v1013, 65535
      %v1046 = vshra.s32 %v1013, 16
      %v1047 = vcvt.s32.f32 %v1045
      %v1048 = vcvt.s32.f32 %v1046
      %1049 = vmin.xlane.f32.xlu0 %v1048
      %v1050 = vpop.xlane.xlu0 %1049
      %vm1051 = vcmp.eq.f32.partialorder %v1048, %v1050
      %v1052 = vsel %vm1051, %v1047, inf
      %1053 = vmin.xlane.f32.xlu0 %v1052
      %v1054 = vpop.xlane.xlu0 %1053
      %v1055 = vcvt.f32.s32 %v1054
      %v1056 = vcvt.f32.s32 %v1050
      %v1057 = vshll.u32 %v1056, 16
      %v1058 = vadd.s32 %v1057, %v1055
      %v1059 = vand.u32 %v1014, 65535
      %v1060 = vshra.s32 %v1014, 16
      %v1061 = vcvt.s32.f32 %v1059
      %v1062 = vcvt.s32.f32 %v1060
      %1063 = vmin.xlane.f32.xlu0 %v1062
      %v1064 = vpop.xlane.xlu0 %1063
      %vm1065 = vcmp.eq.f32.partialorder %v1062, %v1064
      %v1066 = vsel %vm1065, %v1061, inf
      %1067 = vmin.xlane.f32.xlu0 %v1066
      %v1068 = vpop.xlane.xlu0 %1067
      %v1069 = vcvt.f32.s32 %v1068
      %v1070 = vcvt.f32.s32 %v1064
      %v1071 = vshll.u32 %v1070, 16
      %v1072 = vadd.s32 %v1071, %v1069
      %v1073 = vand.u32 %v1015, 65535
      %v1074 = vshra.s32 %v1015, 16
      %v1075 = vcvt.s32.f32 %v1073
      %v1076 = vcvt.s32.f32 %v1074
      %1077 = vmin.xlane.f32.xlu0 %v1076
      %v1078 = vpop.xlane.xlu0 %1077
      %vm1079 = vcmp.eq.f32.partialorder %v1076, %v1078
      %v1080 = vsel %vm1079, %v1075, inf
      %1081 = vmin.xlane.f32.xlu0 %v1080
      %v1082 = vpop.xlane.xlu0 %1081
      %v1083 = vcvt.f32.s32 %v1082
      %v1084 = vcvt.f32.s32 %v1078
      %v1085 = vshll.u32 %v1084, 16
      %v1086 = vadd.s32 %v1085, %v1083
      %v1087 = vand.u32 %v1016, 65535
      %v1088 = vshra.s32 %v1016, 16
      %v1089 = vcvt.s32.f32 %v1087
      %v1090 = vcvt.s32.f32 %v1088
      %1091 = vmin.xlane.f32.xlu0 %v1090
      %v1092 = vpop.xlane.xlu0 %1091
      %vm1093 = vcmp.eq.f32.partialorder %v1090, %v1092
      %v1094 = vsel %vm1093, %v1089, inf
      %1095 = vmin.xlane.f32.xlu0 %v1094
      %v1096 = vpop.xlane.xlu0 %1095
      %v1097 = vcvt.f32.s32 %v1096
      %v1098 = vcvt.f32.s32 %v1092
      %v1099 = vshll.u32 %v1098, 16
      %v1100 = vadd.s32 %v1099, %v1097
      %v1101 = vand.u32 %v1017, 65535
      %v1102 = vshra.s32 %v1017, 16
      %v1103 = vcvt.s32.f32 %v1101
      %v1104 = vcvt.s32.f32 %v1102
      %1105 = vmin.xlane.f32.xlu0 %v1104
      %v1106 = vpop.xlane.xlu0 %1105
      %vm1107 = vcmp.eq.f32.partialorder %v1104, %v1106
      %v1108 = vsel %vm1107, %v1103, inf
      %1109 = vmin.xlane.f32.xlu0 %v1108
      %v1110 = vpop.xlane.xlu0 %1109
      %v1111 = vcvt.f32.s32 %v1110
      %v1112 = vcvt.f32.s32 %v1106
      %v1113 = vshll.u32 %v1112, 16
      %v1114 = vadd.s32 %v1113, %v1111
      %v1115 = vand.u32 %v1018, 65535
      %v1116 = vshra.s32 %v1018, 16
      %v1117 = vcvt.s32.f32 %v1115
      %v1118 = vcvt.s32.f32 %v1116
      %1119 = vmin.xlane.f32.xlu0 %v1118
      %v1120 = vpop.xlane.xlu0 %1119
      %vm1121 = vcmp.eq.f32.partialorder %v1118, %v1120
      %v1122 = vsel %vm1121, %v1117, inf
      %1123 = vmin.xlane.f32.xlu0 %v1122
      %v1124 = vpop.xlane.xlu0 %1123
      %v1125 = vcvt.f32.s32 %v1124
      %v1126 = vcvt.f32.s32 %v1120
      %v1127 = vshll.u32 %v1126, 16
      %v1128 = vadd.s32 %v1127, %v1125
      %v1129 = vand.u32 %v1019, 65535
      %v1130 = vshra.s32 %v1019, 16
      %v1131 = vcvt.s32.f32 %v1129
      %v1132 = vcvt.s32.f32 %v1130
      %1133 = vmin.xlane.f32.xlu0 %v1132
      %v1134 = vpop.xlane.xlu0 %1133
      %vm1135 = vcmp.eq.f32.partialorder %v1132, %v1134
      %v1136 = vsel %vm1135, %v1131, inf
      %1137 = vmin.xlane.f32.xlu0 %v1136
      %v1138 = vpop.xlane.xlu0 %1137
      %v1139 = vcvt.f32.s32 %v1138
      %v1140 = vcvt.f32.s32 %v1134
      %v1141 = vshll.u32 %v1140, 16
      %v1142 = vadd.s32 %v1141, %v1139
      %v1143 = vand.u32 %v1020, 65535
      %v1144 = vshra.s32 %v1020, 16
      %v1145 = vcvt.s32.f32 %v1143
      %v1146 = vcvt.s32.f32 %v1144
      %1147 = vmin.xlane.f32.xlu0 %v1146
      %v1148 = vpop.xlane.xlu0 %1147
      %vm1149 = vcmp.eq.f32.partialorder %v1146, %v1148
      %v1150 = vsel %vm1149, %v1145, inf
      %1151 = vmin.xlane.f32.xlu0 %v1150
      %v1152 = vpop.xlane.xlu0 %1151
      %v1153 = vcvt.f32.s32 %v1152
      %v1154 = vcvt.f32.s32 %v1148
      %v1155 = vshll.u32 %v1154, 16
      %v1156 = vadd.s32 %v1155, %v1153
      %v1157 = vand.u32 %v1021, 65535
      %v1158 = vshra.s32 %v1021, 16
      %v1159 = vcvt.s32.f32 %v1157
      %v1160 = vcvt.s32.f32 %v1158
      %1161 = vmin.xlane.f32.xlu0 %v1160
      %v1162 = vpop.xlane.xlu0 %1161
      %vm1163 = vcmp.eq.f32.partialorder %v1160, %v1162
      %v1164 = vsel %vm1163, %v1159, inf
      %1165 = vmin.xlane.f32.xlu0 %v1164
      %v1166 = vpop.xlane.xlu0 %1165
      %v1167 = vcvt.f32.s32 %v1166
      %v1168 = vcvt.f32.s32 %v1162
      %v1169 = vshll.u32 %v1168, 16
      %v1170 = vadd.s32 %v1169, %v1167
      %v1171 = vand.u32 %v1022, 65535
      %v1172 = vshra.s32 %v1022, 16
      %v1173 = vcvt.s32.f32 %v1171
      %v1174 = vcvt.s32.f32 %v1172
      %1175 = vmin.xlane.f32.xlu0 %v1174
      %v1176 = vpop.xlane.xlu0 %1175
      %vm1177 = vcmp.eq.f32.partialorder %v1174, %v1176
      %v1178 = vsel %vm1177, %v1173, inf
      %1179 = vmin.xlane.f32.xlu0 %v1178
      %v1180 = vpop.xlane.xlu0 %1179
      %v1181 = vcvt.f32.s32 %v1180
      %v1182 = vcvt.f32.s32 %v1176
      %v1183 = vshll.u32 %v1182, 16
      %v1184 = vadd.s32 %v1183, %v1181
      %v1185 = vand.u32 %v1023, 65535
      %v1186 = vshra.s32 %v1023, 16
      %v1187 = vcvt.s32.f32 %v1185
      %v1188 = vcvt.s32.f32 %v1186
      %1189 = vmin.xlane.f32.xlu0 %v1188
      %v1190 = vpop.xlane.xlu0 %1189
      %vm1191 = vcmp.eq.f32.partialorder %v1188, %v1190
      %v1192 = vsel %vm1191, %v1187, inf
      %1193 = vmin.xlane.f32.xlu0 %v1192
      %v1194 = vpop.xlane.xlu0 %1193
      %v1195 = vcvt.f32.s32 %v1194
      %v1196 = vcvt.f32.s32 %v1190
      %v1197 = vshll.u32 %v1196, 16
      %v1198 = vadd.s32 %v1197, %v1195
      %v1199 = vand.u32 %v1024, 65535
      %v1200 = vshra.s32 %v1024, 16
      %v1201 = vcvt.s32.f32 %v1199
      %v1202 = vcvt.s32.f32 %v1200
      %1203 = vmin.xlane.f32.xlu0 %v1202
      %v1204 = vpop.xlane.xlu0 %1203
      %vm1205 = vcmp.eq.f32.partialorder %v1202, %v1204
      %v1206 = vsel %vm1205, %v1201, inf
      %1207 = vmin.xlane.f32.xlu0 %v1206
      %v1208 = vpop.xlane.xlu0 %1207
      %v1209 = vcvt.f32.s32 %v1208
      %v1210 = vcvt.f32.s32 %v1204
      %v1211 = vshll.u32 %v1210, 16
      %v1212 = vadd.s32 %v1211, %v1209
      %v1213 = vand.u32 %v1025, 65535
      %v1214 = vshra.s32 %v1025, 16
      %v1215 = vcvt.s32.f32 %v1213
      %v1216 = vcvt.s32.f32 %v1214
      %1217 = vmin.xlane.f32.xlu0 %v1216
      %v1218 = vpop.xlane.xlu0 %1217
      %vm1219 = vcmp.eq.f32.partialorder %v1216, %v1218
      %v1220 = vsel %vm1219, %v1215, inf
      %1221 = vmin.xlane.f32.xlu0 %v1220
      %v1222 = vpop.xlane.xlu0 %1221
      %v1223 = vcvt.f32.s32 %v1222
      %v1224 = vcvt.f32.s32 %v1218
      %v1225 = vshll.u32 %v1224, 16
      %v1226 = vadd.s32 %v1225, %v1223
      %v1227 = vand.u32 %v1026, 65535
      %v1228 = vshra.s32 %v1026, 16
      %v1229 = vcvt.s32.f32 %v1227
      %v1230 = vcvt.s32.f32 %v1228
      %1231 = vmin.xlane.f32.xlu0 %v1230
      %v1232 = vpop.xlane.xlu0 %1231
      %vm1233 = vcmp.eq.f32.partialorder %v1230, %v1232
      %v1234 = vsel %vm1233, %v1229, inf
      %1235 = vmin.xlane.f32.xlu0 %v1234
      %v1236 = vpop.xlane.xlu0 %1235
      %v1237 = vcvt.f32.s32 %v1236
      %v1238 = vcvt.f32.s32 %v1232
      %v1239 = vshll.u32 %v1238, 16
      %v1240 = vadd.s32 %v1239, %v1237
      %v1241 = vand.u32 %v1027, 65535
      %v1242 = vshra.s32 %v1027, 16
      %v1243 = vcvt.s32.f32 %v1241
      %v1244 = vcvt.s32.f32 %v1242
      %1245 = vmin.xlane.f32.xlu0 %v1244
      %v1246 = vpop.xlane.xlu0 %1245
      %vm1247 = vcmp.eq.f32.partialorder %v1244, %v1246
      %v1248 = vsel %vm1247, %v1243, inf
      %1249 = vmin.xlane.f32.xlu0 %v1248
      %v1250 = vpop.xlane.xlu0 %1249
      %v1251 = vcvt.f32.s32 %v1250
      %v1252 = vcvt.f32.s32 %v1246
      %v1253 = vshll.u32 %v1252, 16
      %v1254 = vadd.s32 %v1253, %v1251
      %v1255 = vand.u32 %v1028, 65535
      %v1256 = vshra.s32 %v1028, 16
      %v1257 = vcvt.s32.f32 %v1255
      %v1258 = vcvt.s32.f32 %v1256
      %1259 = vmin.xlane.f32.xlu0 %v1258
      %v1260 = vpop.xlane.xlu0 %1259
      %vm1261 = vcmp.eq.f32.partialorder %v1258, %v1260
      %v1262 = vsel %vm1261, %v1257, inf
      %1263 = vmin.xlane.f32.xlu0 %v1262
      %v1264 = vpop.xlane.xlu0 %1263
      %v1265 = vcvt.f32.s32 %v1264
      %v1266 = vcvt.f32.s32 %v1260
      %v1267 = vshll.u32 %v1266, 16
      %v1268 = vadd.s32 %v1267, %v1265
      %v1269 = vand.u32 %v1029, 65535
      %v1270 = vshra.s32 %v1029, 16
      %v1271 = vcvt.s32.f32 %v1269
      %v1272 = vcvt.s32.f32 %v1270
      %1273 = vmin.xlane.f32.xlu0 %v1272
      %v1274 = vpop.xlane.xlu0 %1273
      %vm1275 = vcmp.eq.f32.partialorder %v1272, %v1274
      %v1276 = vsel %vm1275, %v1271, inf
      %1277 = vmin.xlane.f32.xlu0 %v1276
      %v1278 = vpop.xlane.xlu0 %1277
      %v1279 = vcvt.f32.s32 %v1278
      %v1280 = vcvt.f32.s32 %v1274
      %v1281 = vshll.u32 %v1280, 16
      %v1282 = vadd.s32 %v1281, %v1279
      %v1283 = vand.u32 %v1030, 65535
      %v1284 = vshra.s32 %v1030, 16
      %v1285 = vcvt.s32.f32 %v1283
      %v1286 = vcvt.s32.f32 %v1284
      %1287 = vmin.xlane.f32.xlu0 %v1286
      %v1288 = vpop.xlane.xlu0 %1287
      %vm1289 = vcmp.eq.f32.partialorder %v1286, %v1288
      %v1290 = vsel %vm1289, %v1285, inf
      %1291 = vmin.xlane.f32.xlu0 %v1290
      %v1292 = vpop.xlane.xlu0 %1291
      %v1293 = vcvt.f32.s32 %v1292
      %v1294 = vcvt.f32.s32 %v1288
      %v1295 = vshll.u32 %v1294, 16
      %v1296 = vadd.s32 %v1295, %v1293
      %v1297 = vand.u32 %v1031, 65535
      %v1298 = vshra.s32 %v1031, 16
      %v1299 = vcvt.s32.f32 %v1297
      %v1300 = vcvt.s32.f32 %v1298
      %1301 = vmin.xlane.f32.xlu0 %v1300
      %v1302 = vpop.xlane.xlu0 %1301
      %vm1303 = vcmp.eq.f32.partialorder %v1300, %v1302
      %v1304 = vsel %vm1303, %v1299, inf
      %1305 = vmin.xlane.f32.xlu0 %v1304
      %v1306 = vpop.xlane.xlu0 %1305
      %v1307 = vcvt.f32.s32 %v1306
      %v1308 = vcvt.f32.s32 %v1302
      %v1309 = vshll.u32 %v1308, 16
      %v1310 = vadd.s32 %v1309, %v1307
      %v1311 = vand.u32 %v1032, 65535
      %v1312 = vshra.s32 %v1032, 16
      %v1313 = vcvt.s32.f32 %v1311
      %v1314 = vcvt.s32.f32 %v1312
      %1315 = vmin.xlane.f32.xlu0 %v1314
      %v1316 = vpop.xlane.xlu0 %1315
      %vm1317 = vcmp.eq.f32.partialorder %v1314, %v1316
      %v1318 = vsel %vm1317, %v1313, inf
      %1319 = vmin.xlane.f32.xlu0 %v1318
      %v1320 = vpop.xlane.xlu0 %1319
      %v1321 = vcvt.f32.s32 %v1320
      %v1322 = vcvt.f32.s32 %v1316
      %v1323 = vshll.u32 %v1322, 16
      %v1324 = vadd.s32 %v1323, %v1321
      %v1325 = vand.u32 %v1033, 65535
      %v1326 = vshra.s32 %v1033, 16
      %v1327 = vcvt.s32.f32 %v1325
      %v1328 = vcvt.s32.f32 %v1326
      %1329 = vmin.xlane.f32.xlu0 %v1328
      %v1330 = vpop.xlane.xlu0 %1329
      %vm1331 = vcmp.eq.f32.partialorder %v1328, %v1330
      %v1332 = vsel %vm1331, %v1327, inf
      %1333 = vmin.xlane.f32.xlu0 %v1332
      %v1334 = vpop.xlane.xlu0 %1333
      %v1335 = vcvt.f32.s32 %v1334
      %v1336 = vcvt.f32.s32 %v1330
      %v1337 = vshll.u32 %v1336, 16
      %v1338 = vadd.s32 %v1337, %v1335
      %v1339 = vand.u32 %v1034, 65535
      %v1340 = vshra.s32 %v1034, 16
      %v1341 = vcvt.s32.f32 %v1339
      %v1342 = vcvt.s32.f32 %v1340
      %1343 = vmin.xlane.f32.xlu0 %v1342
      %v1344 = vpop.xlane.xlu0 %1343
      %vm1345 = vcmp.eq.f32.partialorder %v1342, %v1344
      %v1346 = vsel %vm1345, %v1341, inf
      %1347 = vmin.xlane.f32.xlu0 %v1346
      %v1348 = vpop.xlane.xlu0 %1347
      %v1349 = vcvt.f32.s32 %v1348
      %v1350 = vcvt.f32.s32 %v1344
      %v1351 = vshll.u32 %v1350, 16
      %v1352 = vadd.s32 %v1351, %v1349
      %v1353 = vand.u32 %v1035, 65535
      %v1354 = vshra.s32 %v1035, 16
      %v1355 = vcvt.s32.f32 %v1353
      %v1356 = vcvt.s32.f32 %v1354
      %1357 = vmin.xlane.f32.xlu0 %v1356
      %v1358 = vpop.xlane.xlu0 %1357
      %vm1359 = vcmp.eq.f32.partialorder %v1356, %v1358
      %v1360 = vsel %vm1359, %v1355, inf
      %1361 = vmin.xlane.f32.xlu0 %v1360
      %v1362 = vpop.xlane.xlu0 %1361
      %v1363 = vcvt.f32.s32 %v1362
      %v1364 = vcvt.f32.s32 %v1358
      %v1365 = vshll.u32 %v1364, 16
      %v1366 = vadd.s32 %v1365, %v1363
      %v1367 = vand.u32 %v1036, 65535
      %v1368 = vshra.s32 %v1036, 16
      %v1369 = vcvt.s32.f32 %v1367
      %v1370 = vcvt.s32.f32 %v1368
      %1371 = vmin.xlane.f32.xlu0 %v1370
      %v1372 = vpop.xlane.xlu0 %1371
      %vm1373 = vcmp.eq.f32.partialorder %v1370, %v1372
      %v1374 = vsel %vm1373, %v1369, inf
      %1375 = vmin.xlane.f32.xlu0 %v1374
      %v1376 = vpop.xlane.xlu0 %1375
      %v1377 = vcvt.f32.s32 %v1376
      %v1378 = vcvt.f32.s32 %v1372
      %v1379 = vshll.u32 %v1378, 16
      %v1380 = vadd.s32 %v1379, %v1377
      %v1381 = vand.u32 %v1037, 65535
      %v1382 = vshra.s32 %v1037, 16
      %v1383 = vcvt.s32.f32 %v1381
      %v1384 = vcvt.s32.f32 %v1382
      %1385 = vmin.xlane.f32.xlu0 %v1384
      %v1386 = vpop.xlane.xlu0 %1385
      %vm1387 = vcmp.eq.f32.partialorder %v1384, %v1386
      %v1388 = vsel %vm1387, %v1383, inf
      %1389 = vmin.xlane.f32.xlu0 %v1388
      %v1390 = vpop.xlane.xlu0 %1389
      %v1391 = vcvt.f32.s32 %v1390
      %v1392 = vcvt.f32.s32 %v1386
      %v1393 = vshll.u32 %v1392, 16
      %v1394 = vadd.s32 %v1393, %v1391
      %v1395 = vand.u32 %v1038, 65535
      %v1396 = vshra.s32 %v1038, 16
      %v1397 = vcvt.s32.f32 %v1395
      %v1398 = vcvt.s32.f32 %v1396
      %1399 = vmin.xlane.f32.xlu0 %v1398
      %v1400 = vpop.xlane.xlu0 %1399
      %vm1401 = vcmp.eq.f32.partialorder %v1398, %v1400
      %v1402 = vsel %vm1401, %v1397, inf
      %1403 = vmin.xlane.f32.xlu0 %v1402
      %v1404 = vpop.xlane.xlu0 %1403
      %v1405 = vcvt.f32.s32 %v1404
      %v1406 = vcvt.f32.s32 %v1400
      %v1407 = vshll.u32 %v1406, 16
      %v1408 = vadd.s32 %v1407, %v1405
      %v1409 = vand.u32 %v1039, 65535
      %v1410 = vshra.s32 %v1039, 16
      %v1411 = vcvt.s32.f32 %v1409
      %v1412 = vcvt.s32.f32 %v1410
      %1413 = vmin.xlane.f32.xlu0 %v1412
      %v1414 = vpop.xlane.xlu0 %1413
      %vm1415 = vcmp.eq.f32.partialorder %v1412, %v1414
      %v1416 = vsel %vm1415, %v1411, inf
      %1417 = vmin.xlane.f32.xlu0 %v1416
      %v1418 = vpop.xlane.xlu0 %1417
      %v1419 = vcvt.f32.s32 %v1418
      %v1420 = vcvt.f32.s32 %v1414
      %v1421 = vshll.u32 %v1420, 16
      %v1422 = vadd.s32 %v1421, %v1419
      %v1423 = vand.u32 %v1040, 65535
      %v1424 = vshra.s32 %v1040, 16
      %v1425 = vcvt.s32.f32 %v1423
      %v1426 = vcvt.s32.f32 %v1424
      %1427 = vmin.xlane.f32.xlu0 %v1426
      %v1428 = vpop.xlane.xlu0 %1427
      %vm1429 = vcmp.eq.f32.partialorder %v1426, %v1428
      %v1430 = vsel %vm1429, %v1425, inf
      %1431 = vmin.xlane.f32.xlu0 %v1430
      %v1432 = vpop.xlane.xlu0 %1431
      %v1433 = vcvt.f32.s32 %v1432
      %v1434 = vcvt.f32.s32 %v1428
      %v1435 = vshll.u32 %v1434, 16
      %v1436 = vadd.s32 %v1435, %v1433
      %v1437 = vand.u32 %v1041, 65535
      %v1438 = vshra.s32 %v1041, 16
      %v1439 = vcvt.s32.f32 %v1437
      %v1440 = vcvt.s32.f32 %v1438
      %1441 = vmin.xlane.f32.xlu0 %v1440
      %v1442 = vpop.xlane.xlu0 %1441
      %vm1443 = vcmp.eq.f32.partialorder %v1440, %v1442
      %v1444 = vsel %vm1443, %v1439, inf
      %1445 = vmin.xlane.f32.xlu0 %v1444
      %v1446 = vpop.xlane.xlu0 %1445
      %v1447 = vcvt.f32.s32 %v1446
      %v1448 = vcvt.f32.s32 %v1442
      %v1449 = vshll.u32 %v1448, 16
      %v1450 = vadd.s32 %v1449, %v1447
      %v1451 = vand.u32 %v1042, 65535
      %v1452 = vshra.s32 %v1042, 16
      %v1453 = vcvt.s32.f32 %v1451
      %v1454 = vcvt.s32.f32 %v1452
      %1455 = vmin.xlane.f32.xlu0 %v1454
      %v1456 = vpop.xlane.xlu0 %1455
      %vm1457 = vcmp.eq.f32.partialorder %v1454, %v1456
      %v1458 = vsel %vm1457, %v1453, inf
      %1459 = vmin.xlane.f32.xlu0 %v1458
      %v1460 = vpop.xlane.xlu0 %1459
      %v1461 = vcvt.f32.s32 %v1460
      %v1462 = vcvt.f32.s32 %v1456
      %v1463 = vshll.u32 %v1462, 16
      %v1464 = vadd.s32 %v1463, %v1461
      %v1465 = vand.u32 %v1043, 65535
      %v1466 = vshra.s32 %v1043, 16
      %v1467 = vcvt.s32.f32 %v1465
      %v1468 = vcvt.s32.f32 %v1466
      %1469 = vmin.xlane.f32.xlu0 %v1468
      %v1470 = vpop.xlane.xlu0 %1469
      %vm1471 = vcmp.eq.f32.partialorder %v1468, %v1470
      %v1472 = vsel %vm1471, %v1467, inf
      %1473 = vmin.xlane.f32.xlu0 %v1472
      %v1474 = vpop.xlane.xlu0 %1473
      %v1475 = vcvt.f32.s32 %v1474
      %v1476 = vcvt.f32.s32 %v1470
      %v1477 = vshll.u32 %v1476, 16
      %v1478 = vadd.s32 %v1477, %v1475
      %v1479 = vand.u32 %v1044, 65535
      %v1480 = vshra.s32 %v1044, 16
      %v1481 = vcvt.s32.f32 %v1479
      %v1482 = vcvt.s32.f32 %v1480
      %1483 = vmin.xlane.f32.xlu0 %v1482
      %v1484 = vpop.xlane.xlu0 %1483
      %vm1485 = vcmp.eq.f32.partialorder %v1482, %v1484
      %v1486 = vsel %vm1485, %v1481, inf
      %1487 = vmin.xlane.f32.xlu0 %v1486
      %v1488 = vpop.xlane.xlu0 %1487
      %v1489 = vcvt.f32.s32 %v1488
      %v1490 = vcvt.f32.s32 %v1484
      %v1491 = vshll.u32 %v1490, 16
      %v1492 = vadd.s32 %v1491, %v1489
      %vm1493 = vcmp.eq.s32.totalorder %v980, %v1058
      %vm1494 = vcmp.eq.s32.totalorder %v980, %v1072
      %vm1495 = vcmp.eq.s32.totalorder %v980, %v1086
      %vm1496 = vcmp.eq.s32.totalorder %v980, %v1100
      %vm1497 = vcmp.eq.s32.totalorder %v980, %v1114
      %vm1498 = vcmp.eq.s32.totalorder %v980, %v1128
      %vm1499 = vcmp.eq.s32.totalorder %v980, %v1142
      %vm1500 = vcmp.eq.s32.totalorder %v980, %v1156
      %vm1501 = vcmp.eq.s32.totalorder %v980, %v1170
      %vm1502 = vcmp.eq.s32.totalorder %v980, %v1184
      %vm1503 = vcmp.eq.s32.totalorder %v980, %v1198
      %vm1504 = vcmp.eq.s32.totalorder %v980, %v1212
      %vm1505 = vcmp.eq.s32.totalorder %v980, %v1226
      %vm1506 = vcmp.eq.s32.totalorder %v980, %v1240
      %vm1507 = vcmp.eq.s32.totalorder %v980, %v1254
      %vm1508 = vcmp.eq.s32.totalorder %v980, %v1268
      %vm1509 = vcmp.eq.s32.totalorder %v980, %v1282
      %vm1510 = vcmp.eq.s32.totalorder %v980, %v1296
      %vm1511 = vcmp.eq.s32.totalorder %v980, %v1310
      %vm1512 = vcmp.eq.s32.totalorder %v980, %v1324
      %vm1513 = vcmp.eq.s32.totalorder %v980, %v1338
      %vm1514 = vcmp.eq.s32.totalorder %v980, %v1352
      %vm1515 = vcmp.eq.s32.totalorder %v980, %v1366
      %vm1516 = vcmp.eq.s32.totalorder %v980, %v1380
      %vm1517 = vcmp.eq.s32.totalorder %v980, %v1394
      %vm1518 = vcmp.eq.s32.totalorder %v980, %v1408
      %vm1519 = vcmp.eq.s32.totalorder %v980, %v1422
      %vm1520 = vcmp.eq.s32.totalorder %v980, %v1436
      %vm1521 = vcmp.eq.s32.totalorder %v980, %v1450
      %vm1522 = vcmp.eq.s32.totalorder %v980, %v1464
      %vm1523 = vcmp.eq.s32.totalorder %v980, %v1478
      %vm1524 = vcmp.eq.s32.totalorder %v980, %v1492
      %v1525 = vsel %vm1493, 1, 0
      %v1526 = vsel %vm1494, 1, 0
      %v1527 = vsel %vm1495, 1, 0
      %v1528 = vsel %vm1496, 1, 0
      %v1529 = vsel %vm1497, 1, 0
      %v1530 = vsel %vm1498, 1, 0
      %v1531 = vsel %vm1499, 1, 0
      %v1532 = vsel %vm1500, 1, 0
      %v1533 = vsel %vm1501, 1, 0
      %v1534 = vsel %vm1502, 1, 0
      %v1535 = vsel %vm1503, 1, 0
      %v1536 = vsel %vm1504, 1, 0
      %v1537 = vsel %vm1505, 1, 0
      %v1538 = vsel %vm1506, 1, 0
      %v1539 = vsel %vm1507, 1, 0
      %v1540 = vsel %vm1508, 1, 0
      %v1541 = vsel %vm1509, 1, 0
      %v1542 = vsel %vm1510, 1, 0
      %v1543 = vsel %vm1511, 1, 0
      %v1544 = vsel %vm1512, 1, 0
      %v1545 = vsel %vm1513, 1, 0
      %v1546 = vsel %vm1514, 1, 0
      %v1547 = vsel %vm1515, 1, 0
      %v1548 = vsel %vm1516, 1, 0
      %v1549 = vsel %vm1517, 1, 0
      %v1550 = vsel %vm1518, 1, 0
      %v1551 = vsel %vm1519, 1, 0
      %v1552 = vsel %vm1520, 1, 0
      %v1553 = vsel %vm1521, 1, 0
      %v1554 = vsel %vm1522, 1, 0
      %v1555 = vsel %vm1523, 1, 0
      %v1556 = vsel %vm1524, 1, 0
      %v1557 = vcvt.s32.f32 %v1525
      %v1558 = vcvt.s32.f32 %v1526
      %v1559 = vcvt.s32.f32 %v1527
      %v1560 = vcvt.s32.f32 %v1528
      %v1561 = vcvt.s32.f32 %v1529
      %v1562 = vcvt.s32.f32 %v1530
      %v1563 = vcvt.s32.f32 %v1531
      %v1564 = vcvt.s32.f32 %v1532
      %v1565 = vcvt.s32.f32 %v1533
      %v1566 = vcvt.s32.f32 %v1534
      %v1567 = vcvt.s32.f32 %v1535
      %v1568 = vcvt.s32.f32 %v1536
      %v1569 = vcvt.s32.f32 %v1537
      %v1570 = vcvt.s32.f32 %v1538
      %v1571 = vcvt.s32.f32 %v1539
      %v1572 = vcvt.s32.f32 %v1540
      %v1573 = vcvt.s32.f32 %v1541
      %v1574 = vcvt.s32.f32 %v1542
      %v1575 = vcvt.s32.f32 %v1543
      %v1576 = vcvt.s32.f32 %v1544
      %v1577 = vcvt.s32.f32 %v1545
      %v1578 = vcvt.s32.f32 %v1546
      %v1579 = vcvt.s32.f32 %v1547
      %v1580 = vcvt.s32.f32 %v1548
      %v1581 = vcvt.s32.f32 %v1549
      %v1582 = vcvt.s32.f32 %v1550
      %v1583 = vcvt.s32.f32 %v1551
      %v1584 = vcvt.s32.f32 %v1552
      %v1585 = vcvt.s32.f32 %v1553
      %v1586 = vcvt.s32.f32 %v1554
      %v1587 = vcvt.s32.f32 %v1555
      %v1588 = vcvt.s32.f32 %v1556
      %v1589 = vld [vmem:[%s5] sm:$0xff]
      %v1590 = vld [vmem:[%s5 + $0x8] sm:$0xff]
      %v1591 = vld [vmem:[%s5 + $0x10] sm:$0xff]
      %v1592 = vld [vmem:[%s5 + $0x18] sm:$0xff]
      %v1593 = vld [vmem:[%s5 + $0x20] sm:$0xff]
      %v1594 = vld [vmem:[%s5 + $0x28] sm:$0xff]
      %v1595 = vld [vmem:[%s5 + $0x30] sm:$0xff]
      %v1596 = vld [vmem:[%s5 + $0x38] sm:$0xff]
      %v1597 = vld [vmem:[%s5 + $0x40] sm:$0xff]
      %v1598 = vld [vmem:[%s5 + $0x48] sm:$0xff]
      %v1599 = vld [vmem:[%s5 + $0x50] sm:$0xff]
      %v1600 = vld [vmem:[%s5 + $0x58] sm:$0xff]
      %v1601 = vld [vmem:[%s5 + $0x60] sm:$0xff]
      %v1602 = vld [vmem:[%s5 + $0x68] sm:$0xff]
      %v1603 = vld [vmem:[%s5 + $0x70] sm:$0xff]
      %v1604 = vld [vmem:[%s5 + $0x78] sm:$0xff]
      %v1605 = vld [vmem:[%s6] sm:$0x1]
      %v1607 = vlaneseq
      %v1608 = vshrl.u32 %v1607, 7
      %v1609 = vsub.s32 0, %v1608
      %v1610 = vrot.slane %v1605, %v1609
      %1612 = vmatprep.subr.mxu0 0.0
      %1613 = vmatpush1.msra.mxu0 %v1589
      %1614 = vmatprep.subr.mxu0 0.0
      %1615 = vmatpush1.msra.mxu0 %v1590
      %1616 = vmatprep.subr.mxu0 0.0
      %1617 = vmatpush1.msra.mxu0 %v1591
      %1618 = vmatprep.subr.mxu0 0.0
      %1619 = vmatpush1.msra.mxu0 %v1592
      %1620 = vmatprep.subr.mxu0 0.0
      %1621 = vmatpush1.msra.mxu0 %v1593
      %1622 = vmatprep.subr.mxu0 0.0
      %1623 = vmatpush1.msra.mxu0 %v1594
      %1624 = vmatprep.subr.mxu0 0.0
      %1625 = vmatpush1.msra.mxu0 %v1595
      %1626 = vmatprep.subr.mxu0 0.0
      %1627 = vmatpush1.msra.mxu0 %v1596
      %1628 = vmatprep.subr.mxu0 0.0
      %1629 = vmatpush1.msra.mxu0 %v1597
      %1630 = vmatprep.subr.mxu0 0.0
      %1631 = vmatpush1.msra.mxu0 %v1598
      %1632 = vmatprep.subr.mxu0 0.0
      %1633 = vmatpush1.msra.mxu0 %v1599
      %1634 = vmatprep.subr.mxu0 0.0
      %1635 = vmatpush1.msra.mxu0 %v1600
      %1636 = vmatprep.subr.mxu0 0.0
      %1637 = vmatpush1.msra.mxu0 %v1601
      %1638 = vmatprep.subr.mxu0 0.0
      %1639 = vmatpush1.msra.mxu0 %v1602
      %1640 = vmatprep.subr.mxu0 0.0
      %1641 = vmatpush1.msra.mxu0 %v1603
      %1642 = vmatprep.subr.mxu0 0.0
      %1643 = vmatpush1.msra.mxu0 %v1604
      %1644 = vmatprep.subr.mxu0 0.0
      %1645 = vmatpush1.msra.mxu0 0.0
      %1646 = vmatprep.subr.mxu0 0.0
      %1647 = vmatpush1.msra.mxu0 0.0
      %1648 = vmatprep.subr.mxu0 0.0
      %1649 = vmatpush1.msra.mxu0 0.0
      %1650 = vmatprep.subr.mxu0 0.0
      %1651 = vmatpush1.msra.mxu0 0.0
      %1652 = vmatprep.subr.mxu0 0.0
      %1653 = vmatpush1.msra.mxu0 0.0
      %1654 = vmatprep.subr.mxu0 0.0
      %1655 = vmatpush1.msra.mxu0 0.0
      %1656 = vmatprep.subr.mxu0 0.0
      %1657 = vmatpush1.msra.mxu0 0.0
      %1658 = vmatprep.subr.mxu0 0.0
      %1659 = vmatpush1.msra.mxu0 0.0
      %1660 = vmatprep.subr.mxu0 0.0
      %1661 = vmatpush1.msra.mxu0 0.0
      %1662 = vmatprep.subr.mxu0 0.0
      %1663 = vmatpush1.msra.mxu0 0.0
      %1664 = vmatprep.subr.mxu0 0.0
      %1665 = vmatpush1.msra.mxu0 0.0
      %1666 = vmatprep.subr.mxu0 0.0
      %1667 = vmatpush1.msra.mxu0 0.0
      %1668 = vmatprep.subr.mxu0 0.0
      %1669 = vmatpush1.msra.mxu0 0.0
      %1670 = vmatprep.subr.mxu0 0.0
      %1671 = vmatpush1.msra.mxu0 0.0
      %1672 = vmatprep.subr.mxu0 0.0
      %1673 = vmatpush1.msra.mxu0 0.0
      %1674 = vmatprep.subr.mxu0 0.0
      %1675 = vmatpush1.msra.mxu0 0.0
      %1676 = vmatprep.mubr.f32.mxu0 0.0
      %1677 = vmatmul.mubr.f32.gmra.mrb[0].mxu0 %v1557
      %v1678 = vpop.f32.mrb[0].mxu0
      %v1679 = vadd.f32 %v1610, %v1678
      %v1680 = vpop.f32.mrb[0].mxu0
      %1681 = vmatprep.mubr.f32.mxu0 0.0
      %1682 = vmatmul.mubr.f32.gmra.mrb[0].mxu0 %v1558
      %v1683 = vpop.f32.mrb[0].mxu0
      %v1684 = vadd.f32 %v1610, %v1683
      %v1685 = vpop.f32.mrb[0].mxu0
      %1686 = vmatprep.mubr.f32.mxu0 0.0
      %1687 = vmatmul.mubr.f32.gmra.mrb[0].mxu0 %v1559
      %v1688 = vpop.f32.mrb[0].mxu0
      %v1689 = vadd.f32 %v1610, %v1688
      %v1690 = vpop.f32.mrb[0].mxu0
      %1691 = vmatprep.mubr.f32.mxu0 0.0
      %1692 = vmatmul.mubr.f32.gmra.mrb[0].mxu0 %v1560
      %v1693 = vpop.f32.mrb[0].mxu0
      %v1694 = vadd.f32 %v1610, %v1693
      %v1695 = vpop.f32.mrb[0].mxu0
      %1696 = vmatprep.mubr.f32.mxu0 0.0
      %1697 = vmatmul.mubr.f32.gmra.mrb[0].mxu0 %v1561
      %v1698 = vpop.f32.mrb[0].mxu0
      %v1699 = vadd.f32 %v1610, %v1698
      %v1700 = vpop.f32.mrb[0].mxu0
      %1701 = vmatprep.mubr.f32.mxu0 0.0
      %1702 = vmatmul.mubr.f32.gmra.mrb[0].mxu0 %v1562
      %v1703 = vpop.f32.mrb[0].mxu0
      %v1704 = vadd.f32 %v1610, %v1703
      %v1705 = vpop.f32.mrb[0].mxu0
      %1706 = vmatprep.mubr.f32.mxu0 0.0
      %1707 = vmatmul.mubr.f32.gmra.mrb[0].mxu0 %v1563
      %v1708 = vpop.f32.mrb[0].mxu0
      %v1709 = vadd.f32 %v1610, %v1708
      %v1710 = vpop.f32.mrb[0].mxu0
      %1711 = vmatprep.mubr.f32.mxu0 0.0
      %1712 = vmatmul.mubr.f32.gmra.mrb[0].mxu0 %v1564
      %v1713 = vpop.f32.mrb[0].mxu0
      %v1714 = vadd.f32 %v1610, %v1713
      %v1715 = vpop.f32.mrb[0].mxu0
      %1716 = vmatprep.mubr.f32.mxu0 0.0
      %1717 = vmatmul.mubr.f32.gmra.mrb[0].mxu0 %v1565
      %v1718 = vpop.f32.mrb[0].mxu0
      %v1719 = vadd.f32 %v1610, %v1718
      %v1720 = vpop.f32.mrb[0].mxu0
      %1721 = vmatprep.mubr.f32.mxu0 0.0
      %1722 = vmatmul.mubr.f32.gmra.mrb[0].mxu0 %v1566
      %v1723 = vpop.f32.mrb[0].mxu0
      %v1724 = vadd.f32 %v1610, %v1723
      %v1725 = vpop.f32.mrb[0].mxu0
      %1726 = vmatprep.mubr.f32.mxu0 0.0
      %1727 = vmatmul.mubr.f32.gmra.mrb[0].mxu0 %v1567
      %v1728 = vpop.f32.mrb[0].mxu0
      %v1729 = vadd.f32 %v1610, %v1728
      %v1730 = vpop.f32.mrb[0].mxu0
      %1731 = vmatprep.mubr.f32.mxu0 0.0
      %1732 = vmatmul.mubr.f32.gmra.mrb[0].mxu0 %v1568
      %v1733 = vpop.f32.mrb[0].mxu0
      %v1734 = vadd.f32 %v1610, %v1733
      %v1735 = vpop.f32.mrb[0].mxu0
      %1736 = vmatprep.mubr.f32.mxu0 0.0
      %1737 = vmatmul.mubr.f32.gmra.mrb[0].mxu0 %v1569
      %v1738 = vpop.f32.mrb[0].mxu0
      %v1739 = vadd.f32 %v1610, %v1738
      %v1740 = vpop.f32.mrb[0].mxu0
      %1741 = vmatprep.mubr.f32.mxu0 0.0
      %1742 = vmatmul.mubr.f32.gmra.mrb[0].mxu0 %v1570
      %v1743 = vpop.f32.mrb[0].mxu0
      %v1744 = vadd.f32 %v1610, %v1743
      %v1745 = vpop.f32.mrb[0].mxu0
      %1746 = vmatprep.mubr.f32.mxu0 0.0
      %1747 = vmatmul.mubr.f32.gmra.mrb[0].mxu0 %v1571
      %v1748 = vpop.f32.mrb[0].mxu0
      %v1749 = vadd.f32 %v1610, %v1748
      %v1750 = vpop.f32.mrb[0].mxu0
      %1751 = vmatprep.mubr.f32.mxu0 0.0
      %1752 = vmatmul.mubr.f32.gmra.mrb[0].mxu0 %v1572
      %v1753 = vpop.f32.mrb[0].mxu0
      %v1754 = vadd.f32 %v1610, %v1753
      %v1755 = vpop.f32.mrb[0].mxu0
      %1756 = vmatprep.mubr.f32.mxu0 0.0
      %1757 = vmatmul.mubr.f32.gmra.mrb[0].mxu0 %v1573
      %v1758 = vpop.f32.mrb[0].mxu0
      %v1759 = vadd.f32 %v1610, %v1758
      %v1760 = vpop.f32.mrb[0].mxu0
      %1761 = vmatprep.mubr.f32.mxu0 0.0
      %1762 = vmatmul.mubr.f32.gmra.mrb[0].mxu0 %v1574
      %v1763 = vpop.f32.mrb[0].mxu0
      %v1764 = vadd.f32 %v1610, %v1763
      %v1765 = vpop.f32.mrb[0].mxu0
      %1766 = vmatprep.mubr.f32.mxu0 0.0
      %1767 = vmatmul.mubr.f32.gmra.mrb[0].mxu0 %v1575
      %v1768 = vpop.f32.mrb[0].mxu0
      %v1769 = vadd.f32 %v1610, %v1768
      %v1770 = vpop.f32.mrb[0].mxu0
      %1771 = vmatprep.mubr.f32.mxu0 0.0
      %1772 = vmatmul.mubr.f32.gmra.mrb[0].mxu0 %v1576
      %v1773 = vpop.f32.mrb[0].mxu0
      %v1774 = vadd.f32 %v1610, %v1773
      %v1775 = vpop.f32.mrb[0].mxu0
      %1776 = vmatprep.mubr.f32.mxu0 0.0
      %1777 = vmatmul.mubr.f32.gmra.mrb[0].mxu0 %v1577
      %v1778 = vpop.f32.mrb[0].mxu0
      %v1779 = vadd.f32 %v1610, %v1778
      %v1780 = vpop.f32.mrb[0].mxu0
      %1781 = vmatprep.mubr.f32.mxu0 0.0
      %1782 = vmatmul.mubr.f32.gmra.mrb[0].mxu0 %v1578
      %v1783 = vpop.f32.mrb[0].mxu0
      %v1784 = vadd.f32 %v1610, %v1783
      %v1785 = vpop.f32.mrb[0].mxu0
      %1786 = vmatprep.mubr.f32.mxu0 0.0
      %1787 = vmatmul.mubr.f32.gmra.mrb[0].mxu0 %v1579
      %v1788 = vpop.f32.mrb[0].mxu0
      %v1789 = vadd.f32 %v1610, %v1788
      %v1790 = vpop.f32.mrb[0].mxu0
      %1791 = vmatprep.mubr.f32.mxu0 0.0
      %1792 = vmatmul.mubr.f32.gmra.mrb[0].mxu0 %v1580
      %v1793 = vpop.f32.mrb[0].mxu0
      %v1794 = vadd.f32 %v1610, %v1793
      %v1795 = vpop.f32.mrb[0].mxu0
      %1796 = vmatprep.mubr.f32.mxu0 0.0
      %1797 = vmatmul.mubr.f32.gmra.mrb[0].mxu0 %v1581
      %v1798 = vpop.f32.mrb[0].mxu0
      %v1799 = vadd.f32 %v1610, %v1798
      %v1800 = vpop.f32.mrb[0].mxu0
      %1801 = vmatprep.mubr.f32.mxu0 0.0
      %1802 = vmatmul.mubr.f32.gmra.mrb[0].mxu0 %v1582
      %v1803 = vpop.f32.mrb[0].mxu0
      %v1804 = vadd.f32 %v1610, %v1803
      %v1805 = vpop.f32.mrb[0].mxu0
      %1806 = vmatprep.mubr.f32.mxu0 0.0
      %1807 = vmatmul.mubr.f32.gmra.mrb[0].mxu0 %v1583
      %v1808 = vpop.f32.mrb[0].mxu0
      %v1809 = vadd.f32 %v1610, %v1808
      %v1810 = vpop.f32.mrb[0].mxu0
      %1811 = vmatprep.mubr.f32.mxu0 0.0
      %1812 = vmatmul.mubr.f32.gmra.mrb[0].mxu0 %v1584
      %v1813 = vpop.f32.mrb[0].mxu0
      %v1814 = vadd.f32 %v1610, %v1813
      %v1815 = vpop.f32.mrb[0].mxu0
      %1816 = vmatprep.mubr.f32.mxu0 0.0
      %1817 = vmatmul.mubr.f32.gmra.mrb[0].mxu0 %v1585
      %v1818 = vpop.f32.mrb[0].mxu0
      %v1819 = vadd.f32 %v1610, %v1818
      %v1820 = vpop.f32.mrb[0].mxu0
      %1821 = vmatprep.mubr.f32.mxu0 0.0
      %1822 = vmatmul.mubr.f32.gmra.mrb[0].mxu0 %v1586
      %v1823 = vpop.f32.mrb[0].mxu0
      %v1824 = vadd.f32 %v1610, %v1823
      %v1825 = vpop.f32.mrb[0].mxu0
      %1826 = vmatprep.mubr.f32.mxu0 0.0
      %1827 = vmatmul.mubr.f32.gmra.mrb[0].mxu0 %v1587
      %v1828 = vpop.f32.mrb[0].mxu0
      %v1829 = vadd.f32 %v1610, %v1828
      %v1830 = vpop.f32.mrb[0].mxu0
      %1831 = vmatprep.mubr.f32.mxu0 0.0
      %1832 = vmatmul.mubr.f32.gmra.mrb[0].mxu0 %v1588
      %v1833 = vpop.f32.mrb[0].mxu0
      %v1834 = vadd.f32 %v1610, %v1833
      %v1835 = vpop.f32.mrb[0].mxu0
      %1836 = vdwg.mxu0
      %vm1837 = vcmask 392192
      %1838 = vst.msk [vmem:[%s313] sm:$0xff] %vm1837, %v1679
      %1839 = vst.msk [vmem:[%s313 + $0x8] sm:$0xff] %vm1837, %v1684
      %1840 = vst.msk [vmem:[%s313 + $0x10] sm:$0xff] %vm1837, %v1689
      %1841 = vst.msk [vmem:[%s313 + $0x18] sm:$0xff] %vm1837, %v1694
      %1842 = vst.msk [vmem:[%s313 + $0x20] sm:$0xff] %vm1837, %v1699
      %1843 = vst.msk [vmem:[%s313 + $0x28] sm:$0xff] %vm1837, %v1704
      %1844 = vst.msk [vmem:[%s313 + $0x30] sm:$0xff] %vm1837, %v1709
      %1845 = vst.msk [vmem:[%s313 + $0x38] sm:$0xff] %vm1837, %v1714
      %1846 = vst.msk [vmem:[%s313 + $0x40] sm:$0xff] %vm1837, %v1719
      %1847 = vst.msk [vmem:[%s313 + $0x48] sm:$0xff] %vm1837, %v1724
      %1848 = vst.msk [vmem:[%s313 + $0x50] sm:$0xff] %vm1837, %v1729
      %1849 = vst.msk [vmem:[%s313 + $0x58] sm:$0xff] %vm1837, %v1734
      %1850 = vst.msk [vmem:[%s313 + $0x60] sm:$0xff] %vm1837, %v1739
      %1851 = vst.msk [vmem:[%s313 + $0x68] sm:$0xff] %vm1837, %v1744
      %1852 = vst.msk [vmem:[%s313 + $0x70] sm:$0xff] %vm1837, %v1749
      %1853 = vst.msk [vmem:[%s313 + $0x78] sm:$0xff] %vm1837, %v1754
      %1854 = vst.msk [vmem:[%s313 + $0x80] sm:$0xff] %vm1837, %v1759
      %1855 = vst.msk [vmem:[%s313 + $0x88] sm:$0xff] %vm1837, %v1764
      %1856 = vst.msk [vmem:[%s313 + $0x90] sm:$0xff] %vm1837, %v1769
      %1857 = vst.msk [vmem:[%s313 + $0x98] sm:$0xff] %vm1837, %v1774
      %1858 = vst.msk [vmem:[%s313 + $0xa0] sm:$0xff] %vm1837, %v1779
      %1859 = vst.msk [vmem:[%s313 + $0xa8] sm:$0xff] %vm1837, %v1784
      %1860 = vst.msk [vmem:[%s313 + $0xb0] sm:$0xff] %vm1837, %v1789
      %1861 = vst.msk [vmem:[%s313 + $0xb8] sm:$0xff] %vm1837, %v1794
      %1862 = vst.msk [vmem:[%s313 + $0xc0] sm:$0xff] %vm1837, %v1799
      %1863 = vst.msk [vmem:[%s313 + $0xc8] sm:$0xff] %vm1837, %v1804
      %1864 = vst.msk [vmem:[%s313 + $0xd0] sm:$0xff] %vm1837, %v1809
      %1865 = vst.msk [vmem:[%s313 + $0xd8] sm:$0xff] %vm1837, %v1814
      %1866 = vst.msk [vmem:[%s313 + $0xe0] sm:$0xff] %vm1837, %v1819
      %1867 = vst.msk [vmem:[%s313 + $0xe8] sm:$0xff] %vm1837, %v1824
      %1868 = vst.msk [vmem:[%s313 + $0xf0] sm:$0xff] %vm1837, %v1829
      %1869 = vst.msk [vmem:[%s313 + $0xf8] sm:$0xff] %vm1837, %v1834
      %s1870 = smul.u32 %s20, 256
      %v1871 = vlaneseq
      %v1872 = vshrl.u32 %v1871, 7
      %v1873 = vadd.s32 %v1872, 8
      %v1874 = vadd.s32 %v1872, 16
      %v1875 = vadd.s32 %v1872, 24
      %v1876 = vadd.s32 %v1872, 32
      %v1877 = vadd.s32 %v1872, 40
      %v1878 = vadd.s32 %v1872, 48
      %v1879 = vadd.s32 %v1872, 56
      %v1880 = vadd.s32 %v1872, 64
      %v1881 = vadd.s32 %v1872, 72
      %v1882 = vadd.s32 %v1872, 80
      %v1883 = vadd.s32 %v1872, 88
      %v1884 = vadd.s32 %v1872, 96
      %v1885 = vadd.s32 %v1872, 104
      %v1886 = vadd.s32 %v1872, 112
      %v1887 = vadd.s32 %v1872, 120
      %v1888 = vadd.s32 %v1872, 128
      %v1889 = vadd.s32 %v1872, 136
      %v1890 = vadd.s32 %v1872, 144
      %v1891 = vadd.s32 %v1872, 152
      %v1892 = vadd.s32 %v1872, 160
      %v1893 = vadd.s32 %v1872, 168
      %v1894 = vadd.s32 %v1872, 176
      %v1895 = vadd.s32 %v1872, 184
      %v1896 = vadd.s32 %v1872, 192
      %v1897 = vadd.s32 %v1872, 200
      %v1898 = vadd.s32 %v1872, 208
      %v1899 = vadd.s32 %v1872, 216
      %v1900 = vadd.s32 %v1872, 224
      %v1901 = vadd.s32 %v1872, 232
      %v1902 = vadd.s32 %v1872, 240
      %v1903 = vadd.s32 %v1872, 248
      %v1904 = vstv %s1870
      %v1905 = vadd.s32 %v1904, %v1872
      %v1906 = vadd.s32 %v1904, %v1873
      %v1907 = vadd.s32 %v1904, %v1874
      %v1908 = vadd.s32 %v1904, %v1875
      %v1909 = vadd.s32 %v1904, %v1876
      %v1910 = vadd.s32 %v1904, %v1877
      %v1911 = vadd.s32 %v1904, %v1878
      %v1912 = vadd.s32 %v1904, %v1879
      %v1913 = vadd.s32 %v1904, %v1880
      %v1914 = vadd.s32 %v1904, %v1881
      %v1915 = vadd.s32 %v1904, %v1882
      %v1916 = vadd.s32 %v1904, %v1883
      %v1917 = vadd.s32 %v1904, %v1884
      %v1918 = vadd.s32 %v1904, %v1885
      %v1919 = vadd.s32 %v1904, %v1886
      %v1920 = vadd.s32 %v1904, %v1887
      %v1921 = vadd.s32 %v1904, %v1888
      %v1922 = vadd.s32 %v1904, %v1889
      %v1923 = vadd.s32 %v1904, %v1890
      %v1924 = vadd.s32 %v1904, %v1891
      %v1925 = vadd.s32 %v1904, %v1892
      %v1926 = vadd.s32 %v1904, %v1893
      %v1927 = vadd.s32 %v1904, %v1894
      %v1928 = vadd.s32 %v1904, %v1895
      %v1929 = vadd.s32 %v1904, %v1896
      %v1930 = vadd.s32 %v1904, %v1897
      %v1931 = vadd.s32 %v1904, %v1898
      %v1932 = vadd.s32 %v1904, %v1899
      %v1933 = vadd.s32 %v1904, %v1900
      %v1934 = vadd.s32 %v1904, %v1901
      %v1935 = vadd.s32 %v1904, %v1902
      %v1936 = vadd.s32 %v1904, %v1903
      %vm1937 = vcmp.lt.s32.totalorder %v1905, 512
      %vm1938 = vcmp.lt.s32.totalorder %v1906, 512
      %vm1939 = vcmp.lt.s32.totalorder %v1907, 512
      %vm1940 = vcmp.lt.s32.totalorder %v1908, 512
      %vm1941 = vcmp.lt.s32.totalorder %v1909, 512
      %vm1942 = vcmp.lt.s32.totalorder %v1910, 512
      %vm1943 = vcmp.lt.s32.totalorder %v1911, 512
      %vm1944 = vcmp.lt.s32.totalorder %v1912, 512
      %vm1945 = vcmp.lt.s32.totalorder %v1913, 512
      %vm1946 = vcmp.lt.s32.totalorder %v1914, 512
      %vm1947 = vcmp.lt.s32.totalorder %v1915, 512
      %vm1948 = vcmp.lt.s32.totalorder %v1916, 512
      %vm1949 = vcmp.lt.s32.totalorder %v1917, 512
      %vm1950 = vcmp.lt.s32.totalorder %v1918, 512
      %vm1951 = vcmp.lt.s32.totalorder %v1919, 512
      %vm1952 = vcmp.lt.s32.totalorder %v1920, 512
      %vm1953 = vcmp.lt.s32.totalorder %v1921, 512
      %vm1954 = vcmp.lt.s32.totalorder %v1922, 512
      %vm1955 = vcmp.lt.s32.totalorder %v1923, 512
      %vm1956 = vcmp.lt.s32.totalorder %v1924, 512
      %vm1957 = vcmp.lt.s32.totalorder %v1925, 512
      %vm1958 = vcmp.lt.s32.totalorder %v1926, 512
      %vm1959 = vcmp.lt.s32.totalorder %v1927, 512
      %vm1960 = vcmp.lt.s32.totalorder %v1928, 512
      %vm1961 = vcmp.lt.s32.totalorder %v1929, 512
      %vm1962 = vcmp.lt.s32.totalorder %v1930, 512
      %vm1963 = vcmp.lt.s32.totalorder %v1931, 512
      %vm1964 = vcmp.lt.s32.totalorder %v1932, 512
      %vm1965 = vcmp.lt.s32.totalorder %v1933, 512
      %vm1966 = vcmp.lt.s32.totalorder %v1934, 512
      %vm1967 = vcmp.lt.s32.totalorder %v1935, 512
      %vm1968 = vcmp.lt.s32.totalorder %v1936, 512
      %v1969 = vmul.f32 %v523, %v523
      %v1970 = vmul.f32 %v528, %v528
      %v1971 = vmul.f32 %v533, %v533
      %v1972 = vmul.f32 %v538, %v538
      %v1973 = vmul.f32 %v543, %v543
      %v1974 = vmul.f32 %v548, %v548
      %v1975 = vmul.f32 %v553, %v553
      %v1976 = vmul.f32 %v558, %v558
      %v1977 = vmul.f32 %v563, %v563
      %v1978 = vmul.f32 %v568, %v568
      %v1979 = vmul.f32 %v573, %v573
      %v1980 = vmul.f32 %v578, %v578
      %v1981 = vmul.f32 %v583, %v583
      %v1982 = vmul.f32 %v588, %v588
      %v1983 = vmul.f32 %v593, %v593
      %v1984 = vmul.f32 %v598, %v598
      %v1985 = vmul.f32 %v603, %v603
      %v1986 = vmul.f32 %v608, %v608
      %v1987 = vmul.f32 %v613, %v613
      %v1988 = vmul.f32 %v618, %v618
      %v1989 = vmul.f32 %v623, %v623
      %v1990 = vmul.f32 %v628, %v628
      %v1991 = vmul.f32 %v633, %v633
      %v1992 = vmul.f32 %v638, %v638
      %v1993 = vmul.f32 %v643, %v643
      %v1994 = vmul.f32 %v648, %v648
      %v1995 = vmul.f32 %v653, %v653
      %v1996 = vmul.f32 %v658, %v658
      %v1997 = vmul.f32 %v663, %v663
      %v1998 = vmul.f32 %v668, %v668
      %v1999 = vmul.f32 %v673, %v673
      %v2000 = vmul.f32 %v678, %v678
      %v2001 = vsel %vm359, %v1969, 0.0
      %2002 = vadd.xlane.f32.xlu0 %v2001
      %v2003 = vpop.xlane.xlu0 %2002
      %v2004 = vsel %vm359, %v1970, 0.0
      %2005 = vadd.xlane.f32.xlu0 %v2004
      %v2006 = vpop.xlane.xlu0 %2005
      %v2007 = vsel %vm359, %v1971, 0.0
      %2008 = vadd.xlane.f32.xlu0 %v2007
      %v2009 = vpop.xlane.xlu0 %2008
      %v2010 = vsel %vm359, %v1972, 0.0
      %2011 = vadd.xlane.f32.xlu0 %v2010
      %v2012 = vpop.xlane.xlu0 %2011
      %v2013 = vsel %vm359, %v1973, 0.0
      %2014 = vadd.xlane.f32.xlu0 %v2013
      %v2015 = vpop.xlane.xlu0 %2014
      %v2016 = vsel %vm359, %v1974, 0.0
      %2017 = vadd.xlane.f32.xlu0 %v2016
      %v2018 = vpop.xlane.xlu0 %2017
      %v2019 = vsel %vm359, %v1975, 0.0
      %2020 = vadd.xlane.f32.xlu0 %v2019
      %v2021 = vpop.xlane.xlu0 %2020
      %v2022 = vsel %vm359, %v1976, 0.0
      %2023 = vadd.xlane.f32.xlu0 %v2022
      %v2024 = vpop.xlane.xlu0 %2023
      %v2025 = vsel %vm359, %v1977, 0.0
      %2026 = vadd.xlane.f32.xlu0 %v2025
      %v2027 = vpop.xlane.xlu0 %2026
      %v2028 = vsel %vm359, %v1978, 0.0
      %2029 = vadd.xlane.f32.xlu0 %v2028
      %v2030 = vpop.xlane.xlu0 %2029
      %v2031 = vsel %vm359, %v1979, 0.0
      %2032 = vadd.xlane.f32.xlu0 %v2031
      %v2033 = vpop.xlane.xlu0 %2032
      %v2034 = vsel %vm359, %v1980, 0.0
      %2035 = vadd.xlane.f32.xlu0 %v2034
      %v2036 = vpop.xlane.xlu0 %2035
      %v2037 = vsel %vm359, %v1981, 0.0
      %2038 = vadd.xlane.f32.xlu0 %v2037
      %v2039 = vpop.xlane.xlu0 %2038
      %v2040 = vsel %vm359, %v1982, 0.0
      %2041 = vadd.xlane.f32.xlu0 %v2040
      %v2042 = vpop.xlane.xlu0 %2041
      %v2043 = vsel %vm359, %v1983, 0.0
      %2044 = vadd.xlane.f32.xlu0 %v2043
      %v2045 = vpop.xlane.xlu0 %2044
      %v2046 = vsel %vm359, %v1984, 0.0
      %2047 = vadd.xlane.f32.xlu0 %v2046
      %v2048 = vpop.xlane.xlu0 %2047
      %v2049 = vsel %vm359, %v1985, 0.0
      %2050 = vadd.xlane.f32.xlu0 %v2049
      %v2051 = vpop.xlane.xlu0 %2050
      %v2052 = vsel %vm359, %v1986, 0.0
      %2053 = vadd.xlane.f32.xlu0 %v2052
      %v2054 = vpop.xlane.xlu0 %2053
      %v2055 = vsel %vm359, %v1987, 0.0
      %2056 = vadd.xlane.f32.xlu0 %v2055
      %v2057 = vpop.xlane.xlu0 %2056
      %v2058 = vsel %vm359, %v1988, 0.0
      %2059 = vadd.xlane.f32.xlu0 %v2058
      %v2060 = vpop.xlane.xlu0 %2059
      %v2061 = vsel %vm359, %v1989, 0.0
      %2062 = vadd.xlane.f32.xlu0 %v2061
      %v2063 = vpop.xlane.xlu0 %2062
      %v2064 = vsel %vm359, %v1990, 0.0
      %2065 = vadd.xlane.f32.xlu0 %v2064
      %v2066 = vpop.xlane.xlu0 %2065
      %v2067 = vsel %vm359, %v1991, 0.0
      %2068 = vadd.xlane.f32.xlu0 %v2067
      %v2069 = vpop.xlane.xlu0 %2068
      %v2070 = vsel %vm359, %v1992, 0.0
      %2071 = vadd.xlane.f32.xlu0 %v2070
      %v2072 = vpop.xlane.xlu0 %2071
      %v2073 = vsel %vm359, %v1993, 0.0
      %2074 = vadd.xlane.f32.xlu0 %v2073
      %v2075 = vpop.xlane.xlu0 %2074
      %v2076 = vsel %vm359, %v1994, 0.0
      %2077 = vadd.xlane.f32.xlu0 %v2076
      %v2078 = vpop.xlane.xlu0 %2077
      %v2079 = vsel %vm359, %v1995, 0.0
      %2080 = vadd.xlane.f32.xlu0 %v2079
      %v2081 = vpop.xlane.xlu0 %2080
      %v2082 = vsel %vm359, %v1996, 0.0
      %2083 = vadd.xlane.f32.xlu0 %v2082
      %v2084 = vpop.xlane.xlu0 %2083
      %v2085 = vsel %vm359, %v1997, 0.0
      %2086 = vadd.xlane.f32.xlu0 %v2085
      %v2087 = vpop.xlane.xlu0 %2086
      %v2088 = vsel %vm359, %v1998, 0.0
      %2089 = vadd.xlane.f32.xlu0 %v2088
      %v2090 = vpop.xlane.xlu0 %2089
      %v2091 = vsel %vm359, %v1999, 0.0
      %2092 = vadd.xlane.f32.xlu0 %v2091
      %v2093 = vpop.xlane.xlu0 %2092
      %v2094 = vsel %vm359, %v2000, 0.0
      %2095 = vadd.xlane.f32.xlu0 %v2094
      %v2096 = vpop.xlane.xlu0 %2095
      %v2097 = vadd.f32 %v916, %v2003
      %v2098 = vadd.f32 %v918, %v2006
      %v2099 = vadd.f32 %v920, %v2009
      %v2100 = vadd.f32 %v922, %v2012
      %v2101 = vadd.f32 %v924, %v2015
      %v2102 = vadd.f32 %v926, %v2018
      %v2103 = vadd.f32 %v928, %v2021
      %v2104 = vadd.f32 %v930, %v2024
      %v2105 = vadd.f32 %v932, %v2027
      %v2106 = vadd.f32 %v934, %v2030
      %v2107 = vadd.f32 %v936, %v2033
      %v2108 = vadd.f32 %v938, %v2036
      %v2109 = vadd.f32 %v940, %v2039
      %v2110 = vadd.f32 %v942, %v2042
      %v2111 = vadd.f32 %v944, %v2045
      %v2112 = vadd.f32 %v946, %v2048
      %v2113 = vadd.f32 %v948, %v2051
      %v2114 = vadd.f32 %v950, %v2054
      %v2115 = vadd.f32 %v952, %v2057
      %v2116 = vadd.f32 %v954, %v2060
      %v2117 = vadd.f32 %v956, %v2063
      %v2118 = vadd.f32 %v958, %v2066
      %v2119 = vadd.f32 %v960, %v2069
      %v2120 = vadd.f32 %v962, %v2072
      %v2121 = vadd.f32 %v964, %v2075
      %v2122 = vadd.f32 %v966, %v2078
      %v2123 = vadd.f32 %v968, %v2081
      %v2124 = vadd.f32 %v970, %v2084
      %v2125 = vadd.f32 %v972, %v2087
      %v2126 = vadd.f32 %v974, %v2090
      %v2127 = vadd.f32 %v976, %v2093
      %v2128 = vadd.f32 %v978, %v2096
      %v2129 = vsel %vm1937, %v2097, 0.0
      %v2130 = vsel %vm1938, %v2098, 0.0
      %v2131 = vsel %vm1939, %v2099, 0.0
      %v2132 = vsel %vm1940, %v2100, 0.0
      %v2133 = vsel %vm1941, %v2101, 0.0
      %v2134 = vsel %vm1942, %v2102, 0.0
      %v2135 = vsel %vm1943, %v2103, 0.0
      %v2136 = vsel %vm1944, %v2104, 0.0
      %v2137 = vsel %vm1945, %v2105, 0.0
      %v2138 = vsel %vm1946, %v2106, 0.0
      %v2139 = vsel %vm1947, %v2107, 0.0
      %v2140 = vsel %vm1948, %v2108, 0.0
      %v2141 = vsel %vm1949, %v2109, 0.0
      %v2142 = vsel %vm1950, %v2110, 0.0
      %v2143 = vsel %vm1951, %v2111, 0.0
      %v2144 = vsel %vm1952, %v2112, 0.0
      %v2145 = vsel %vm1953, %v2113, 0.0
      %v2146 = vsel %vm1954, %v2114, 0.0
      %v2147 = vsel %vm1955, %v2115, 0.0
      %v2148 = vsel %vm1956, %v2116, 0.0
      %v2149 = vsel %vm1957, %v2117, 0.0
      %v2150 = vsel %vm1958, %v2118, 0.0
      %v2151 = vsel %vm1959, %v2119, 0.0
      %v2152 = vsel %vm1960, %v2120, 0.0
      %v2153 = vsel %vm1961, %v2121, 0.0
      %v2154 = vsel %vm1962, %v2122, 0.0
      %v2155 = vsel %vm1963, %v2123, 0.0
      %v2156 = vsel %vm1964, %v2124, 0.0
      %v2157 = vsel %vm1965, %v2125, 0.0
      %v2158 = vsel %vm1966, %v2126, 0.0
      %v2159 = vsel %vm1967, %v2127, 0.0
      %v2160 = vsel %vm1968, %v2128, 0.0
      %v2161 = vadd.f32 %v2129, %v2130
      %v2162 = vadd.f32 %v2161, %v2131
      %v2163 = vadd.f32 %v2162, %v2132
      %v2164 = vadd.f32 %v2163, %v2133
      %v2165 = vadd.f32 %v2164, %v2134
      %v2166 = vadd.f32 %v2165, %v2135
      %v2167 = vadd.f32 %v2166, %v2136
      %v2168 = vadd.f32 %v2167, %v2137
      %v2169 = vadd.f32 %v2168, %v2138
      %v2170 = vadd.f32 %v2169, %v2139
      %v2171 = vadd.f32 %v2170, %v2140
      %v2172 = vadd.f32 %v2171, %v2141
      %v2173 = vadd.f32 %v2172, %v2142
      %v2174 = vadd.f32 %v2173, %v2143
      %v2175 = vadd.f32 %v2174, %v2144
      %v2176 = vadd.f32 %v2175, %v2145
      %v2177 = vadd.f32 %v2176, %v2146
      %v2178 = vadd.f32 %v2177, %v2147
      %v2179 = vadd.f32 %v2178, %v2148
      %v2180 = vadd.f32 %v2179, %v2149
      %v2181 = vadd.f32 %v2180, %v2150
      %v2182 = vadd.f32 %v2181, %v2151
      %v2183 = vadd.f32 %v2182, %v2152
      %v2184 = vadd.f32 %v2183, %v2153
      %v2185 = vadd.f32 %v2184, %v2154
      %v2186 = vadd.f32 %v2185, %v2155
      %v2187 = vadd.f32 %v2186, %v2156
      %v2188 = vadd.f32 %v2187, %v2157
      %v2189 = vadd.f32 %v2188, %v2158
      %v2190 = vadd.f32 %v2189, %v2159
      %v2191 = vadd.f32 %v2190, %v2160
      %v2192 = vrot.slane %v2191, 4
      %v2193 = vadd.f32 %v2191, %v2192
      %v2194 = vrot.slane %v2193, 2
      %v2195 = vadd.f32 %v2193, %v2194
      %v2196 = vrot.slane %v2195, 1
      %v2197 = vadd.f32 %v2195, %v2196
      %vm2198 = vcmask 0
      %2199 = vst.msk [vmem:[%s317] sm:$0x1] %vm2198, %v2197
      %s2200 = smul.u32 32, %s20
      %p2201 = scmp.lt.s32.totalorder %s2200, 63
      %s2202 = scalar_select %p2201, %s2200, 63
      %s2203 = smul.addr %s2202, 8
      %s2204 = scalar_lea.vmem %s7, %s2203
      %p2205 = scmp.lt.s32.totalorder %s20, 1
      %s2206 = scalar_select %p2205, %s20, 1
      %s2207 = scalar_lea.vmem %s8, %s2206
      // Predicated region
      $region49: #{vqvae_forward.1} parent=47 // pred_check
        %p2208 = pneg %p190
      $region50: #{vqvae_forward.1} parent=47 // pred_check_branch
        %2210 = sbr.rel (%p2208) target = $region52
      $region51: #{vqvae_forward.1} parent=47 // pred_region
        %s2211 = smul.u32 32, %s20
      $region52: #{vqvae_forward.1} parent=47 // pred_fallthru
        _
      // Predicated region
      $region53: #{vqvae_forward.1} parent=47 // pred_check
        %p2212 = pneg %p216
      $region54: #{vqvae_forward.1} parent=47 // pred_check_branch
        %2214 = sbr.rel (%p2212) target = $region56
      $region55: #{vqvae_forward.1} parent=47 // pred_region
        _
      $region56: #{vqvae_forward.1} parent=47 // pred_fallthru
        _
    $region48: #{vqvae_forward.1} parent=5 // pred_fallthru
      _
    %p2215 = scmp.le.s32.totalorder 2, %s15
    // Predicated region
    $region57: #{vqvae_forward.1} parent=5 // pred_check
      %p2216 = pneg %p2215
    $region58: #{vqvae_forward.1} parent=5 // pred_check_branch
      %2218 = sbr.rel (%p2216) target = $region60
    $region59: #{vqvae_forward.1} parent=5 // pred_region
      %s2219 = ssub.s32 %s15, 2
      // Predicated region
      $region61: #{vqvae_forward.1} parent=59 // pred_check
        %p2220 = pneg %p196
      $region62: #{vqvae_forward.1} parent=59 // pred_check_branch
        %2222 = sbr.rel (%p2220) target = $region64
      $region63: #{vqvae_forward.1} parent=59 // pred_region
        %s2223 = smul.u32 32, %s21
        %p2224 = scmp.lt.s32.totalorder %s2223, 63
        %s2225 = scalar_select %p2224, %s2223, 63
        %s2226 = smul.addr %s2225, 8
        %s2227 = scalar_lea.vmem %s7, %s2226
      $region64: #{vqvae_forward.1} parent=59 // pred_fallthru
        _
      // Predicated region
      $region65: #{vqvae_forward.1} parent=59 // pred_check
        %p2228 = pneg %p222
      $region66: #{vqvae_forward.1} parent=59 // pred_check_branch
        %2230 = sbr.rel (%p2228) target = $region68
      $region67: #{vqvae_forward.1} parent=59 // pred_region
        %p2231 = scmp.lt.s32.totalorder %s21, 1
        %s2232 = scalar_select %p2231, %s21, 1
        %s2233 = scalar_lea.vmem %s8, %s2232
      $region68: #{vqvae_forward.1} parent=59 // pred_fallthru
        _
    $region60: #{vqvae_forward.1} parent=5 // pred_fallthru
      _
  $region6: #{vqvae_forward.1} parent=0 // loop_footer
    %s19 = sadd.s32 1, %s15
  $region7: #{vqvae_forward.1} parent=0 // loop_footer_branch
    %14 = sbr.rel target = $region3
  $region8: #{vqvae_forward.1} parent=0 // loop_exit
    _

</llo_original>
